<compile_context>
chip_gen: v6e
topology: v6e:2x2x1
jax: 0.10.0
libtpu: 0.0.40
codegen_flags: <defaults>
</compile_context>

<pallas_src>
import functools

import jax
import jax.numpy as jnp
from jax import lax
from jax.experimental import pallas as pl
from jax.experimental.pallas import tpu as pltpu

_C_TILE = 128  # lane width: channels per block


def _round_up(x, m):
    return (x + m - 1) // m * m


def _dwconv_kernel(w_ref, x_ref, o_ref, *, H, W, KH, KW):
    """Depthwise conv tap loop, channels on the lane axis.

    w_ref: VMEM (KH*KW, C_TILE)      per-tap, per-channel weight vectors
    x_ref: VMEM (1, Hp, Wp, C_TILE)  spatially padded ('same' halo) input slab
    o_ref: VMEM (1, H,  W,  C_TILE)  output slab
    """
    w_all = w_ref[...]  # (KH*KW, Ct) — tiny, loaded once, hoisted out of loop
    acc = jnp.zeros((H, W, o_ref.shape[-1]), jnp.float32)
    for kh in range(KH):          # 15 taps, statically unrolled
        for kw in range(KW):
            idx = kh * KW + kw
            w = w_all[idx:idx + 1, :]                       # (1, Ct), stays 2-D
            # Shifts hit only the H (free) and W (sublane) axes; the lane
            # (channel) axis is never shifted -> pure per-lane vector FMA.
            acc = acc + x_ref[0, kh:kh + H, kw:kw + W, :] * w
    o_ref[0] = acc.astype(o_ref.dtype)


def single_conv_pr(x, weight, kernel_size=(3, 5)):
    """Depthwise conv2d (groups=C_in), padding='same', stride=1, dilation=1,
    bias=False — same forward semantics as SingleConvPR.

    x:      (N, C_in, H, W) float32
    weight: (C_out, 1, KH, KW) float32 (PyTorch grouped-conv layout,
            groups == C_in, so C_out % C_in == 0)
    Returns (N, C_out, H, W).
    """
    N, C_in, H, W = x.shape
    C_out, _, KH, KW = weight.shape
    assert (KH, KW) == tuple(kernel_size)
    assert C_out % C_in == 0
    mult = C_out // C_in

    # PyTorch 'same' (stride 1, dilation 1): total pad = k - 1, extra on the
    # hi side for even kernel dims (exact match to torch's rule).
    ph, pw = KH - 1, KW - 1
    ph_lo, ph_hi = ph // 2, ph - ph // 2
    pw_lo, pw_hi = pw // 2, pw - pw // 2
    Hp, Wp = H + ph, W + pw

    Cpad = _round_up(C_out, _C_TILE)
    n_cblk = Cpad // _C_TILE

    # Single layout pass: NCHW -> NHWC, expand channels for the depthwise
    # multiplier, add the spatial 'same' halo, pad channels to 128 lanes.
    xl = jnp.transpose(x, (0, 2, 3, 1)).astype(jnp.float32)   # (N, H, W, C_in)
    if mult > 1:
        # output channel o reads input channel o // mult
        xl = jnp.repeat(xl, mult, axis=-1)                    # (N, H, W, C_out)
    xl = jnp.pad(xl, ((0, 0), (ph_lo, ph_hi), (pw_lo, pw_hi),
                      (0, Cpad - C_out)))                     # (N, Hp, Wp, Cpad)

    # (KH*KW, Cpad): one per-channel weight vector per filter tap.
    wl = weight.reshape(C_out, KH * KW).astype(jnp.float32)
    wl = jnp.pad(wl, ((0, Cpad - C_out), (0, 0))).T           # (KH*KW, Cpad)

    kernel = functools.partial(_dwconv_kernel, H=H, W=W, KH=KH, KW=KW)

    # TODO(synk): for activations whose full (Hp, Wp, 128) slab exceeds VMEM,
    # add a spatial (H) grid axis with an in-kernel halo fetch.
    out_nhwc = pl.pallas_call(
        kernel,
        out_shape=jax.ShapeDtypeStruct((N, H, W, Cpad), jnp.float32),
        grid_spec=pltpu.PrefetchScalarGridSpec(
            num_scalar_prefetch=0,
            grid=(N, n_cblk),
            in_specs=[
                # per-tap weight vectors for this channel block (VMEM)
                pl.BlockSpec((KH * KW, _C_TILE), lambda n, cb: (0, cb)),
                # full padded spatial slab, one 128-channel block, one batch
                pl.BlockSpec((1, Hp, Wp, _C_TILE), lambda n, cb: (n, 0, 0, cb)),
            ],
            out_specs=pl.BlockSpec((1, H, W, _C_TILE),
                                   lambda n, cb: (n, 0, 0, cb)),
        ),
        compiler_params=pltpu.CompilerParams(
            dimension_semantics=("parallel", "parallel")),
    )(wl, xl)

    # Back to PyTorch's NCHW output layout, dropping the channel padding.
    out = jnp.transpose(out_nhwc[..., :C_out], (0, 3, 1, 2))
    return out.astype(x.dtype)


def _reference(x, weight, groups):
    # Plain-JAX reference: grouped conv, NCHW / OIHW, PyTorch-'same' padding.
    KH, KW = weight.shape[2], weight.shape[3]
    ph, pw = KH - 1, KW - 1
    return lax.conv_general_dilated(
        x, weight,
        window_strides=(1, 1),
        padding=((ph // 2, ph - ph // 2), (pw // 2, pw - pw // 2)),
        dimension_numbers=("NCHW", "OIHW", "NCHW"),
        feature_group_count=groups,
    )


if __name__ == "__main__":
    KH, KW = 3, 5
    key = jax.random.PRNGKey(0)

    # Case 1: depthwise, channel multiplier 1 (out_channels == in_channels).
    N, C_in, H, W = 2, 4, 16, 16
    C_out = C_in
    kx, kw_key, key = jax.random.split(key, 3)
    x = jax.random.normal(kx, (N, C_in, H, W), dtype=jnp.float32)
    # torch.nn.init.uniform_(weight, a=-0.05, b=0.05), shape (C_out, 1, KH, KW)
    weight = jax.random.uniform(kw_key, (C_out, 1, KH, KW),
                                minval=-0.05, maxval=0.05, dtype=jnp.float32)

    out = jax.block_until_ready(single_conv_pr(x, weight, (KH, KW)))
    ref = _reference(x, weight, groups=C_in)
    assert out.shape == ref.shape == (N, C_out, H, W)
    assert jnp.allclose(out, ref, atol=1e-5, rtol=1e-5)

    # Case 2: channel multiplier 2 (out_channels = 2 * in_channels).
    C_out2 = 2 * C_in
    kw2_key, _ = jax.random.split(key)
    weight2 = jax.random.uniform(kw2_key, (C_out2, 1, KH, KW),
                                 minval=-0.05, maxval=0.05, dtype=jnp.float32)
    out2 = jax.block_until_ready(single_conv_pr(x, weight2, (KH, KW)))
    ref2 = _reference(x, weight2, groups=C_in)
    assert out2.shape == ref2.shape == (N, C_out2, H, W)
    assert jnp.allclose(out2, ref2, atol=1e-5, rtol=1e-5)

    print("KERNEL_OK")
</pallas_src>

<mosaic_0001>
module attributes {stable_mosaic.version = 11 : i64} {
  func.func @_dwconv_kernel(%arg0: i32, %arg1: i32, %arg2: memref<15x128xf32, #tpu.memory_space<vmem>>, %arg3: memref<1x18x20x128xf32, #tpu.memory_space<vmem>>, %arg4: memref<1x16x16x128xf32, #tpu.memory_space<vmem>>) attributes {dimension_semantics = [#tpu.dimension_semantics<parallel>, #tpu.dimension_semantics<parallel>], iteration_bounds = array<i64: 2, 1>, scalar_prefetch = 0 : i64, scratch_operands = 0 : i64, tpu.core_type = #tpu.core_type<tc>, window_params = [{transform_indices = @transform_0, window_bounds = array<i64: 15, 128>}, {transform_indices = @transform_1, window_bounds = array<i64: 1, 18, 20, 128>}, {transform_indices = @transform_2, window_bounds = array<i64: 1, 16, 16, 128>}]} {
    %c0 = arith.constant 0 : index
    %c0_0 = arith.constant 0 : index
    %0 = vector.load %arg2[%c0, %c0_0] : memref<15x128xf32, #tpu.memory_space<vmem>>, vector<15x128xf32>
    %cst = arith.constant 0.000000e+00 : f32
    %1 = vector.broadcast %cst : f32 to vector<16x16x128xf32>
    %2 = vector.extract_strided_slice %0 {offsets = [0, 0], sizes = [1, 128], strides = [1, 1]} : vector<15x128xf32> to vector<1x128xf32>
    %c0_1 = arith.constant 0 : index
    %c0_2 = arith.constant 0 : index
    %c0_3 = arith.constant 0 : index
    %c0_4 = arith.constant 0 : index
    %3 = vector.load %arg3[%c0_1, %c0_2, %c0_3, %c0_4] : memref<1x18x20x128xf32, #tpu.memory_space<vmem>>, vector<1x16x16x128xf32>
    %4 = vector.shape_cast %3 : vector<1x16x16x128xf32> to vector<16x16x128xf32>
    %5 = vector.shape_cast %2 : vector<1x128xf32> to vector<1x1x128xf32>
    %6 = vector.broadcast %5 : vector<1x1x128xf32> to vector<16x16x128xf32>
    %7 = arith.mulf %4, %6 : vector<16x16x128xf32>
    %8 = arith.addf %1, %7 : vector<16x16x128xf32>
    %9 = vector.extract_strided_slice %0 {offsets = [1, 0], sizes = [1, 128], strides = [1, 1]} : vector<15x128xf32> to vector<1x128xf32>
    %c0_5 = arith.constant 0 : index
    %c0_6 = arith.constant 0 : index
    %c1 = arith.constant 1 : index
    %c0_7 = arith.constant 0 : index
    %10 = vector.load %arg3[%c0_5, %c0_6, %c1, %c0_7] : memref<1x18x20x128xf32, #tpu.memory_space<vmem>>, vector<1x16x16x128xf32>
    %11 = vector.shape_cast %10 : vector<1x16x16x128xf32> to vector<16x16x128xf32>
    %12 = vector.shape_cast %9 : vector<1x128xf32> to vector<1x1x128xf32>
    %13 = vector.broadcast %12 : vector<1x1x128xf32> to vector<16x16x128xf32>
    %14 = arith.mulf %11, %13 : vector<16x16x128xf32>
    %15 = arith.addf %8, %14 : vector<16x16x128xf32>
    %16 = vector.extract_strided_slice %0 {offsets = [2, 0], sizes = [1, 128], strides = [1, 1]} : vector<15x128xf32> to vector<1x128xf32>
    %c0_8 = arith.constant 0 : index
    %c0_9 = arith.constant 0 : index
    %c2 = arith.constant 2 : index
    %c0_10 = arith.constant 0 : index
    %17 = vector.load %arg3[%c0_8, %c0_9, %c2, %c0_10] : memref<1x18x20x128xf32, #tpu.memory_space<vmem>>, vector<1x16x16x128xf32>
    %18 = vector.shape_cast %17 : vector<1x16x16x128xf32> to vector<16x16x128xf32>
    %19 = vector.shape_cast %16 : vector<1x128xf32> to vector<1x1x128xf32>
    %20 = vector.broadcast %19 : vector<1x1x128xf32> to vector<16x16x128xf32>
    %21 = arith.mulf %18, %20 : vector<16x16x128xf32>
    %22 = arith.addf %15, %21 : vector<16x16x128xf32>
    %23 = vector.extract_strided_slice %0 {offsets = [3, 0], sizes = [1, 128], strides = [1, 1]} : vector<15x128xf32> to vector<1x128xf32>
    %c0_11 = arith.constant 0 : index
    %c0_12 = arith.constant 0 : index
    %c3 = arith.constant 3 : index
    %c0_13 = arith.constant 0 : index
    %24 = vector.load %arg3[%c0_11, %c0_12, %c3, %c0_13] : memref<1x18x20x128xf32, #tpu.memory_space<vmem>>, vector<1x16x16x128xf32>
    %25 = vector.shape_cast %24 : vector<1x16x16x128xf32> to vector<16x16x128xf32>
    %26 = vector.shape_cast %23 : vector<1x128xf32> to vector<1x1x128xf32>
    %27 = vector.broadcast %26 : vector<1x1x128xf32> to vector<16x16x128xf32>
    %28 = arith.mulf %25, %27 : vector<16x16x128xf32>
    %29 = arith.addf %22, %28 : vector<16x16x128xf32>
    %30 = vector.extract_strided_slice %0 {offsets = [4, 0], sizes = [1, 128], strides = [1, 1]} : vector<15x128xf32> to vector<1x128xf32>
    %c0_14 = arith.constant 0 : index
    %c0_15 = arith.constant 0 : index
    %c4 = arith.constant 4 : index
    %c0_16 = arith.constant 0 : index
    %31 = vector.load %arg3[%c0_14, %c0_15, %c4, %c0_16] : memref<1x18x20x128xf32, #tpu.memory_space<vmem>>, vector<1x16x16x128xf32>
    %32 = vector.shape_cast %31 : vector<1x16x16x128xf32> to vector<16x16x128xf32>
    %33 = vector.shape_cast %30 : vector<1x128xf32> to vector<1x1x128xf32>
    %34 = vector.broadcast %33 : vector<1x1x128xf32> to vector<16x16x128xf32>
    %35 = arith.mulf %32, %34 : vector<16x16x128xf32>
    %36 = arith.addf %29, %35 : vector<16x16x128xf32>
    %37 = vector.extract_strided_slice %0 {offsets = [5, 0], sizes = [1, 128], strides = [1, 1]} : vector<15x128xf32> to vector<1x128xf32>
    %c0_17 = arith.constant 0 : index
    %c1_18 = arith.constant 1 : index
    %c0_19 = arith.constant 0 : index
    %c0_20 = arith.constant 0 : index
    %38 = vector.load %arg3[%c0_17, %c1_18, %c0_19, %c0_20] : memref<1x18x20x128xf32, #tpu.memory_space<vmem>>, vector<1x16x16x128xf32>
    %39 = vector.shape_cast %38 : vector<1x16x16x128xf32> to vector<16x16x128xf32>
    %40 = vector.shape_cast %37 : vector<1x128xf32> to vector<1x1x128xf32>
    %41 = vector.broadcast %40 : vector<1x1x128xf32> to vector<16x16x128xf32>
    %42 = arith.mulf %39, %41 : vector<16x16x128xf32>
    %43 = arith.addf %36, %42 : vector<16x16x128xf32>
    %44 = vector.extract_strided_slice %0 {offsets = [6, 0], sizes = [1, 128], strides = [1, 1]} : vector<15x128xf32> to vector<1x128xf32>
    %c0_21 = arith.constant 0 : index
    %c1_22 = arith.constant 1 : index
    %c1_23 = arith.constant 1 : index
    %c0_24 = arith.constant 0 : index
    %45 = vector.load %arg3[%c0_21, %c1_22, %c1_23, %c0_24] : memref<1x18x20x128xf32, #tpu.memory_space<vmem>>, vector<1x16x16x128xf32>
    %46 = vector.shape_cast %45 : vector<1x16x16x128xf32> to vector<16x16x128xf32>
    %47 = vector.shape_cast %44 : vector<1x128xf32> to vector<1x1x128xf32>
    %48 = vector.broadcast %47 : vector<1x1x128xf32> to vector<16x16x128xf32>
    %49 = arith.mulf %46, %48 : vector<16x16x128xf32>
    %50 = arith.addf %43, %49 : vector<16x16x128xf32>
    %51 = vector.extract_strided_slice %0 {offsets = [7, 0], sizes = [1, 128], strides = [1, 1]} : vector<15x128xf32> to vector<1x128xf32>
    %c0_25 = arith.constant 0 : index
    %c1_26 = arith.constant 1 : index
    %c2_27 = arith.constant 2 : index
    %c0_28 = arith.constant 0 : index
    %52 = vector.load %arg3[%c0_25, %c1_26, %c2_27, %c0_28] : memref<1x18x20x128xf32, #tpu.memory_space<vmem>>, vector<1x16x16x128xf32>
    %53 = vector.shape_cast %52 : vector<1x16x16x128xf32> to vector<16x16x128xf32>
    %54 = vector.shape_cast %51 : vector<1x128xf32> to vector<1x1x128xf32>
    %55 = vector.broadcast %54 : vector<1x1x128xf32> to vector<16x16x128xf32>
    %56 = arith.mulf %53, %55 : vector<16x16x128xf32>
    %57 = arith.addf %50, %56 : vector<16x16x128xf32>
    %58 = vector.extract_strided_slice %0 {offsets = [8, 0], sizes = [1, 128], strides = [1, 1]} : vector<15x128xf32> to vector<1x128xf32>
    %c0_29 = arith.constant 0 : index
    %c1_30 = arith.constant 1 : index
    %c3_31 = arith.constant 3 : index
    %c0_32 = arith.constant 0 : index
    %59 = vector.load %arg3[%c0_29, %c1_30, %c3_31, %c0_32] : memref<1x18x20x128xf32, #tpu.memory_space<vmem>>, vector<1x16x16x128xf32>
    %60 = vector.shape_cast %59 : vector<1x16x16x128xf32> to vector<16x16x128xf32>
    %61 = vector.shape_cast %58 : vector<1x128xf32> to vector<1x1x128xf32>
    %62 = vector.broadcast %61 : vector<1x1x128xf32> to vector<16x16x128xf32>
    %63 = arith.mulf %60, %62 : vector<16x16x128xf32>
    %64 = arith.addf %57, %63 : vector<16x16x128xf32>
    %65 = vector.extract_strided_slice %0 {offsets = [9, 0], sizes = [1, 128], strides = [1, 1]} : vector<15x128xf32> to vector<1x128xf32>
    %c0_33 = arith.constant 0 : index
    %c1_34 = arith.constant 1 : index
    %c4_35 = arith.constant 4 : index
    %c0_36 = arith.constant 0 : index
    %66 = vector.load %arg3[%c0_33, %c1_34, %c4_35, %c0_36] : memref<1x18x20x128xf32, #tpu.memory_space<vmem>>, vector<1x16x16x128xf32>
    %67 = vector.shape_cast %66 : vector<1x16x16x128xf32> to vector<16x16x128xf32>
    %68 = vector.shape_cast %65 : vector<1x128xf32> to vector<1x1x128xf32>
    %69 = vector.broadcast %68 : vector<1x1x128xf32> to vector<16x16x128xf32>
    %70 = arith.mulf %67, %69 : vector<16x16x128xf32>
    %71 = arith.addf %64, %70 : vector<16x16x128xf32>
    %72 = vector.extract_strided_slice %0 {offsets = [10, 0], sizes = [1, 128], strides = [1, 1]} : vector<15x128xf32> to vector<1x128xf32>
    %c0_37 = arith.constant 0 : index
    %c2_38 = arith.constant 2 : index
    %c0_39 = arith.constant 0 : index
    %c0_40 = arith.constant 0 : index
    %73 = vector.load %arg3[%c0_37, %c2_38, %c0_39, %c0_40] : memref<1x18x20x128xf32, #tpu.memory_space<vmem>>, vector<1x16x16x128xf32>
    %74 = vector.shape_cast %73 : vector<1x16x16x128xf32> to vector<16x16x128xf32>
    %75 = vector.shape_cast %72 : vector<1x128xf32> to vector<1x1x128xf32>
    %76 = vector.broadcast %75 : vector<1x1x128xf32> to vector<16x16x128xf32>
    %77 = arith.mulf %74, %76 : vector<16x16x128xf32>
    %78 = arith.addf %71, %77 : vector<16x16x128xf32>
    %79 = vector.extract_strided_slice %0 {offsets = [11, 0], sizes = [1, 128], strides = [1, 1]} : vector<15x128xf32> to vector<1x128xf32>
    %c0_41 = arith.constant 0 : index
    %c2_42 = arith.constant 2 : index
    %c1_43 = arith.constant 1 : index
    %c0_44 = arith.constant 0 : index
    %80 = vector.load %arg3[%c0_41, %c2_42, %c1_43, %c0_44] : memref<1x18x20x128xf32, #tpu.memory_space<vmem>>, vector<1x16x16x128xf32>
    %81 = vector.shape_cast %80 : vector<1x16x16x128xf32> to vector<16x16x128xf32>
    %82 = vector.shape_cast %79 : vector<1x128xf32> to vector<1x1x128xf32>
    %83 = vector.broadcast %82 : vector<1x1x128xf32> to vector<16x16x128xf32>
    %84 = arith.mulf %81, %83 : vector<16x16x128xf32>
    %85 = arith.addf %78, %84 : vector<16x16x128xf32>
    %86 = vector.extract_strided_slice %0 {offsets = [12, 0], sizes = [1, 128], strides = [1, 1]} : vector<15x128xf32> to vector<1x128xf32>
    %c0_45 = arith.constant 0 : index
    %c2_46 = arith.constant 2 : index
    %c2_47 = arith.constant 2 : index
    %c0_48 = arith.constant 0 : index
    %87 = vector.load %arg3[%c0_45, %c2_46, %c2_47, %c0_48] : memref<1x18x20x128xf32, #tpu.memory_space<vmem>>, vector<1x16x16x128xf32>
    %88 = vector.shape_cast %87 : vector<1x16x16x128xf32> to vector<16x16x128xf32>
    %89 = vector.shape_cast %86 : vector<1x128xf32> to vector<1x1x128xf32>
    %90 = vector.broadcast %89 : vector<1x1x128xf32> to vector<16x16x128xf32>
    %91 = arith.mulf %88, %90 : vector<16x16x128xf32>
    %92 = arith.addf %85, %91 : vector<16x16x128xf32>
    %93 = vector.extract_strided_slice %0 {offsets = [13, 0], sizes = [1, 128], strides = [1, 1]} : vector<15x128xf32> to vector<1x128xf32>
    %c0_49 = arith.constant 0 : index
    %c2_50 = arith.constant 2 : index
    %c3_51 = arith.constant 3 : index
    %c0_52 = arith.constant 0 : index
    %94 = vector.load %arg3[%c0_49, %c2_50, %c3_51, %c0_52] : memref<1x18x20x128xf32, #tpu.memory_space<vmem>>, vector<1x16x16x128xf32>
    %95 = vector.shape_cast %94 : vector<1x16x16x128xf32> to vector<16x16x128xf32>
    %96 = vector.shape_cast %93 : vector<1x128xf32> to vector<1x1x128xf32>
    %97 = vector.broadcast %96 : vector<1x1x128xf32> to vector<16x16x128xf32>
    %98 = arith.mulf %95, %97 : vector<16x16x128xf32>
    %99 = arith.addf %92, %98 : vector<16x16x128xf32>
    %100 = vector.extract_strided_slice %0 {offsets = [14, 0], sizes = [1, 128], strides = [1, 1]} : vector<15x128xf32> to vector<1x128xf32>
    %c0_53 = arith.constant 0 : index
    %c2_54 = arith.constant 2 : index
    %c4_55 = arith.constant 4 : index
    %c0_56 = arith.constant 0 : index
    %101 = vector.load %arg3[%c0_53, %c2_54, %c4_55, %c0_56] : memref<1x18x20x128xf32, #tpu.memory_space<vmem>>, vector<1x16x16x128xf32>
    %102 = vector.shape_cast %101 : vector<1x16x16x128xf32> to vector<16x16x128xf32>
    %103 = vector.shape_cast %100 : vector<1x128xf32> to vector<1x1x128xf32>
    %104 = vector.broadcast %103 : vector<1x1x128xf32> to vector<16x16x128xf32>
    %105 = arith.mulf %102, %104 : vector<16x16x128xf32>
    %106 = arith.addf %99, %105 : vector<16x16x128xf32>
    %c0_57 = arith.constant 0 : index
    %c0_58 = arith.constant 0 : index
    %c0_59 = arith.constant 0 : index
    %c0_60 = arith.constant 0 : index
    %107 = vector.load %arg4[%c0_57, %c0_58, %c0_59, %c0_60] : memref<1x16x16x128xf32, #tpu.memory_space<vmem>>, vector<1x16x16x128xf32>
    %108 = vector.shape_cast %107 : vector<1x16x16x128xf32> to vector<16x16x128xf32>
    %109 = vector.shape_cast %106 : vector<16x16x128xf32> to vector<1x16x16x128xf32>
    tpu.vector_store %arg4[%c0_57, %c0_58, %c0_59, %c0_60], %109 {strides = array<i32>} : memref<1x16x16x128xf32, #tpu.memory_space<vmem>>, vector<1x16x16x128xf32>,
    return
  }
  func.func @transform_0(%arg0: i32, %arg1: i32) -> (i32, i32) {
    %c0_i32 = arith.constant 0 : i32
    %c0_i32_0 = arith.constant 0 : i32
    return %c0_i32, %arg1 : i32, i32
  }
  func.func @transform_1(%arg0: i32, %arg1: i32) -> (i32, i32, i32, i32) {
    %c0_i32 = arith.constant 0 : i32
    %c0_i32_0 = arith.constant 0 : i32
    %c0_i32_1 = arith.constant 0 : i32
    return %arg0, %c0_i32, %c0_i32_0, %arg1 : i32, i32, i32, i32
  }
  func.func @transform_2(%arg0: i32, %arg1: i32) -> (i32, i32, i32, i32) {
    %c0_i32 = arith.constant 0 : i32
    %c0_i32_0 = arith.constant 0 : i32
    %c0_i32_1 = arith.constant 0 : i32
    return %arg0, %c0_i32, %c0_i32_0, %arg1 : i32, i32, i32, i32
  }
}

</mosaic_0001>

<llo_original>
// kernel: tpu_custom_call.1
$region0: #{tpu_custom_call.1}
  #allocation0 [shape = 'u32[]', space=smem, size = 0x4, offset = 0x4, fixed_abs, tag = 'smem constant byte address 0x4 - core index']
  #allocation1 [shape = 'u32[144,128]{1,0:T(1,128)}', space=vmem, size = 0x12000, scoped, tag = 'internal scratch']
  %s0 = inlined_call_operand.vmem [shape: f32[15,128], index: 0, kind: input, shape index: {}]
  %s1 = inlined_call_operand.vmem [shape: f32[2,18,20,128], index: 1, kind: input, shape index: {}]
  %s2 = inlined_call_operand.hbm [shape: f32[2,16,16,128], index: 2, kind: output, shape index: {}]
  %s3 = sld [smem:[#allocation0]]
  $region41: #{tpu_custom_call.1} parent=0
    _
  %s5 = ssub.s32 1, %s3
  %s6 = scalar_select 0, %s5, %s3
  $region1: #{tpu_custom_call.1} parent=0
    #allocation2 [shape = 'u8[262144]{0}', space=vmem, size = 0x40000, scoped, tag = 'output window, operand 0']
    #allocation3 [shape = 's32[2]{0}', space=sflag, size = 0x8, scoped, tag = 'scoped memory for tpu_custom_call.1']
    %7 = vsyncpa [#allocation3], 0
    %s8 = scalar_lea.sflag [#allocation3], 1
    %9 = vsyncpa %s8, 0
    loop: start=0, step=1, limit=4
    $region2: #{tpu_custom_call.1} parent=1 // loop_pre_header
      _
    $region3: #{tpu_custom_call.1} parent=1 // loop_header
      %s11 = sphi 0, %s15
      %p12 = scmp.ge.s32.totalorder %s11, 4
      %s18 = sphi 0, %s30
      %s19 = sphi 0, %s26
      %s20 = sphi 0, %s18
      %s21 = sphi 0, %s19
      %s22 = sphi 0, %s20
      %s23 = sphi 0, %s21
      %s33 = sphi 0, %s35
      %s36 = sphi 0, %s33
      %s37 = sphi 0, %s36
      %s53 = sphi 0, %s37
      %s61 = sphi 0, %s63
      %s64 = sphi 0, %s61
      %s65 = sphi 0, %s64
      %s81 = sphi 0, %s65
      %s89 = sphi 0, %s91
      %s92 = sphi 0, %s89
      %s93 = sphi 0, %s92
      %s109 = sphi 0, %s93
    $region4: #{tpu_custom_call.1} parent=1 // loop_header_branch
      %14 = sbr.rel (%p12) target = $region8
    $region5: #{tpu_custom_call.1} parent=1 // loop_body
      %s16 = ssub.s32 %s11, 1
      %s17 = ssub.s32 %s11, 2
      %s24 = sadd.s32 1, %s19
      %p25 = scmp.ge.s32.totalorder %s24, 1
      %s26 = scalar_select %p25, 0, %s24
      %s27 = sadd.s32 1, %s18
      %s28 = scalar_select %p25, %s27, %s18
      %p29 = scmp.ge.s32.totalorder %s28, 2
      %s30 = scalar_select %p29, 0, %s28
      %s31 = ssub.s32 %s19, %s26
      %p32 = scmp.eq.s32.totalorder %s31, 0
      %s34 = sadd.s32 %s33, 1
      %s35 = scalar_select %p32, %s33, %s34
      %p38 = pneg %p32
      %p39 = scmp.eq.s32.totalorder %s11, 1
      %p40 = por %p38, %p39
      %p41 = scmp.ne.s32.totalorder %s33, %s36
      %p42 = scmp.eq.s32.totalorder %s11, 0
      %p43 = por %p41, %p42
      %p44 = scmp.ne.s32.totalorder %s33, %s36
      %p45 = scmp.eq.s32.totalorder %s16, 1
      %p46 = por %p44, %p45
      %p47 = scmp.ne.s32.totalorder %s36, %s37
      %p48 = scmp.eq.s32.totalorder %s16, 0
      %p49 = por %p47, %p48
      %p50 = scmp.ne.s32.totalorder %s36, %s37
      %p51 = scmp.eq.s32.totalorder %s17, 1
      %p52 = por %p50, %p51
      %p54 = scmp.ne.s32.totalorder %s37, %s53
      %p55 = scmp.eq.s32.totalorder %s17, 0
      %p56 = por %p54, %p55
      %s57 = ssub.s32 %s18, %s30
      %s58 = ssub.s32 %s19, %s26
      %s59 = sor.u32 %s57, %s58
      %p60 = scmp.eq.s32.totalorder %s59, 0
      %s62 = sadd.s32 %s61, 1
      %s63 = scalar_select %p60, %s61, %s62
      %p66 = pneg %p60
      %p67 = scmp.eq.s32.totalorder %s11, 1
      %p68 = por %p66, %p67
      %p69 = scmp.ne.s32.totalorder %s61, %s64
      %p70 = scmp.eq.s32.totalorder %s11, 0
      %p71 = por %p69, %p70
      %p72 = scmp.ne.s32.totalorder %s61, %s64
      %p73 = scmp.eq.s32.totalorder %s16, 1
      %p74 = por %p72, %p73
      %p75 = scmp.ne.s32.totalorder %s64, %s65
      %p76 = scmp.eq.s32.totalorder %s16, 0
      %p77 = por %p75, %p76
      %p78 = scmp.ne.s32.totalorder %s64, %s65
      %p79 = scmp.eq.s32.totalorder %s17, 1
      %p80 = por %p78, %p79
      %p82 = scmp.ne.s32.totalorder %s65, %s81
      %p83 = scmp.eq.s32.totalorder %s17, 0
      %p84 = por %p82, %p83
      %s85 = ssub.s32 %s18, %s30
      %s86 = ssub.s32 %s19, %s26
      %s87 = sor.u32 %s85, %s86
      %p88 = scmp.eq.s32.totalorder %s87, 0
      %s90 = sadd.s32 %s89, 1
      %s91 = scalar_select %p88, %s89, %s90
      %p94 = pneg %p88
      %p95 = scmp.eq.s32.totalorder %s11, 1
      %p96 = por %p94, %p95
      %p97 = scmp.ne.s32.totalorder %s89, %s92
      %p98 = scmp.eq.s32.totalorder %s11, 0
      %p99 = por %p97, %p98
      %p100 = scmp.ne.s32.totalorder %s89, %s92
      %p101 = scmp.eq.s32.totalorder %s16, 1
      %p102 = por %p100, %p101
      %p103 = scmp.ne.s32.totalorder %s92, %s93
      %p104 = scmp.eq.s32.totalorder %s16, 0
      %p105 = por %p103, %p104
      %p106 = scmp.ne.s32.totalorder %s92, %s93
      %p107 = scmp.eq.s32.totalorder %s17, 1
      %p108 = por %p106, %p107
      %p110 = scmp.ne.s32.totalorder %s93, %s109
      %p111 = scmp.eq.s32.totalorder %s17, 0
      %p112 = por %p110, %p111
      %p113 = scmp.le.s32.totalorder 1, %s11
      %p114 = scmp.lt.s32.totalorder %s11, 3
      %p115 = pnand %p113, %p114
      %p116 = pneg %p115
      // Predicated region
      $region9: #{tpu_custom_call.1} parent=5 // pred_check
        _
      $region10: #{tpu_custom_call.1} parent=5 // pred_check_branch
        %118 = sbr.rel (%p115) target = $region12
      $region11: #{tpu_custom_call.1} parent=5 // pred_region
        %s119 = ssub.s32 %s11, 1
        // Predicated region
        $region13: #{tpu_custom_call.1} parent=11 // pred_check
          %p120 = pneg %p49
        $region14: #{tpu_custom_call.1} parent=11 // pred_check_branch
          %122 = sbr.rel (%p120) target = $region16
        $region15: #{tpu_custom_call.1} parent=11 // pred_region
          %p123 = scmp.lt.s32.totalorder %s21, 0
          %s124 = scalar_select %p123, %s21, 0
          %s125 = smul.addr %s124, 8
          %s126 = scalar_lea.vmem %s0, %s125
        $region16: #{tpu_custom_call.1} parent=11 // pred_fallthru
          _
      $region12: #{tpu_custom_call.1} parent=5 // pred_fallthru
        _
      %p127 = scmp.lt.s32.totalorder %s11, 2
      // Predicated region
      $region17: #{tpu_custom_call.1} parent=5 // pred_check
        %p128 = pneg %p127
      $region18: #{tpu_custom_call.1} parent=5 // pred_check_branch
        %130 = sbr.rel (%p128) target = $region20
      $region19: #{tpu_custom_call.1} parent=5 // pred_region
        // Predicated region
        $region21: #{tpu_custom_call.1} parent=19 // pred_check
          %p131 = pneg %p71
        $region22: #{tpu_custom_call.1} parent=19 // pred_check_branch
          %133 = sbr.rel (%p131) target = $region24
        $region23: #{tpu_custom_call.1} parent=19 // pred_region
          %p134 = scmp.lt.s32.totalorder %s18, 1
          %s135 = scalar_select %p134, %s18, 1
          %p136 = scmp.lt.s32.totalorder %s19, 0
          %s137 = scalar_select %p136, %s19, 0
          %s138 = smul.addr %s135, 54
          %s139 = sadd.s32 %s137, %s138
          %s140 = smul.addr %s139, 8
          %s141 = scalar_lea.vmem %s1, %s140
        $region24: #{tpu_custom_call.1} parent=19 // pred_fallthru
          _
      $region20: #{tpu_custom_call.1} parent=5 // pred_fallthru
        _
      %p142 = scmp.le.s32.totalorder 1, %s11
      %p143 = scmp.lt.s32.totalorder %s11, 3
      %p144 = pnand %p142, %p143
      %p145 = pneg %p144
      // Predicated region
      $region25: #{tpu_custom_call.1} parent=5 // pred_check
        _
      $region26: #{tpu_custom_call.1} parent=5 // pred_check_branch
        %147 = sbr.rel (%p144) target = $region28
      $region27: #{tpu_custom_call.1} parent=5 // pred_region
        %s148 = ssub.s32 %s11, 1
        %p149 = scmp.lt.s32.totalorder %s21, 0
        %s150 = scalar_select %p149, %s21, 0
        %s151 = smul.addr %s150, 8
        %s152 = scalar_lea.vmem %s0, %s151
        %p153 = pneg %p49
        %p154 = pneg %p46
        %p155 = scmp.lt.s32.totalorder %s20, 1
        %s156 = scalar_select %p155, %s20, 1
        %p157 = scmp.lt.s32.totalorder %s21, 0
        %s158 = scalar_select %p157, %s21, 0
        %s159 = smul.addr %s156, 54
        %s160 = sadd.s32 %s158, %s159
        %s161 = smul.addr %s160, 8
        %s162 = scalar_lea.vmem %s1, %s161
        %p163 = pneg %p77
        %p164 = pneg %p74
        %p165 = pneg %p105
        %p166 = pneg %p102
        %s167 = sand.u32 %s92, 1
        %s168 = scalar_lea.sflag [#allocation3], %s167
        %s169 = sand.u32 %s92, 1
        %s170 = smul.addr %s169, 256
        %s171 = scalar_lea.vmem [#allocation2], %s170
        %p172 = scmp.lt.s32.totalorder %s21, 0
        %s173 = scalar_select %p172, %s21, 0
        %s174 = smul.addr %s173, 8
        %s175 = scalar_lea.vmem %s0, %s174
        %p176 = scmp.lt.s32.totalorder %s20, 1
        %s177 = scalar_select %p176, %s20, 1
        %p178 = scmp.lt.s32.totalorder %s21, 0
        %s179 = scalar_select %p178, %s21, 0
        %s180 = smul.addr %s177, 54
        %s181 = sadd.s32 %s179, %s180
        %s182 = smul.addr %s181, 8
        %s183 = scalar_lea.vmem %s1, %s182
        %v184 = vld [vmem:[%s175] sm:$0xff]
        %v185 = vld [vmem:[%s175 + $0x8] sm:$0x7f]
        %v186 = vld [vmem:[%s183] sm:$0xff]
        %v187 = vld [vmem:[%s183 + $0x8] sm:$0xff]
        %v188 = vld [vmem:[%s183 + $0x18] sm:$0xff]
        %v189 = vld [vmem:[%s183 + $0x20] sm:$0xff]
        %v190 = vld [vmem:[%s183 + $0x30] sm:$0xff]
        %v191 = vld [vmem:[%s183 + $0x38] sm:$0xff]
        %v192 = vld [vmem:[%s183 + $0x48] sm:$0xff]
        %v193 = vld [vmem:[%s183 + $0x50] sm:$0xff]
        %v194 = vld [vmem:[%s183 + $0x60] sm:$0xff]
        %v195 = vld [vmem:[%s183 + $0x68] sm:$0xff]
        %v196 = vld [vmem:[%s183 + $0x78] sm:$0xff]
        %v197 = vld [vmem:[%s183 + $0x80] sm:$0xff]
        %v198 = vld [vmem:[%s183 + $0x90] sm:$0xff]
        %v199 = vld [vmem:[%s183 + $0x98] sm:$0xff]
        %v200 = vld [vmem:[%s183 + $0xa8] sm:$0xff]
        %v201 = vld [vmem:[%s183 + $0xb0] sm:$0xff]
        %v202 = vld [vmem:[%s183 + $0xc0] sm:$0xff]
        %v203 = vld [vmem:[%s183 + $0xc8] sm:$0xff]
        %v204 = vld [vmem:[%s183 + $0xd8] sm:$0xff]
        %v205 = vld [vmem:[%s183 + $0xe0] sm:$0xff]
        %v206 = vld [vmem:[%s183 + $0xf0] sm:$0xff]
        %v207 = vld [vmem:[%s183 + $0xf8] sm:$0xff]
        %v208 = vld [vmem:[%s183 + $0x108] sm:$0xff]
        %v209 = vld [vmem:[%s183 + $0x110] sm:$0xff]
        %v210 = vld [vmem:[%s183 + $0x120] sm:$0xff]
        %v211 = vld [vmem:[%s183 + $0x128] sm:$0xff]
        %v212 = vld [vmem:[%s183 + $0x138] sm:$0xff]
        %v213 = vld [vmem:[%s183 + $0x140] sm:$0xff]
        %v214 = vld [vmem:[%s183 + $0x150] sm:$0xff]
        %v215 = vld [vmem:[%s183 + $0x158] sm:$0xff]
        %v216 = vld [vmem:[%s183 + $0x168] sm:$0xff]
        %v217 = vld [vmem:[%s183 + $0x170] sm:$0xff]
        %v218 = vlaneseq
        %v219 = vshrl.u32 %v218, 7
        %v220 = vsub.s32 0, %v219
        %v221 = vrot.slane %v184, %v220
        %v222 = vmul.f32 %v186, %v221
        %v223 = vmul.f32 %v187, %v221
        %v224 = vmul.f32 %v188, %v221
        %v225 = vmul.f32 %v189, %v221
        %v226 = vmul.f32 %v190, %v221
        %v227 = vmul.f32 %v191, %v221
        %v228 = vmul.f32 %v192, %v221
        %v229 = vmul.f32 %v193, %v221
        %v230 = vmul.f32 %v194, %v221
        %v231 = vmul.f32 %v195, %v221
        %v232 = vmul.f32 %v196, %v221
        %v233 = vmul.f32 %v197, %v221
        %v234 = vmul.f32 %v198, %v221
        %v235 = vmul.f32 %v199, %v221
        %v236 = vmul.f32 %v200, %v221
        %v237 = vmul.f32 %v201, %v221
        %v238 = vmul.f32 %v202, %v221
        %v239 = vmul.f32 %v203, %v221
        %v240 = vmul.f32 %v204, %v221
        %v241 = vmul.f32 %v205, %v221
        %v242 = vmul.f32 %v206, %v221
        %v243 = vmul.f32 %v207, %v221
        %v244 = vmul.f32 %v208, %v221
        %v245 = vmul.f32 %v209, %v221
        %v246 = vmul.f32 %v210, %v221
        %v247 = vmul.f32 %v211, %v221
        %v248 = vmul.f32 %v212, %v221
        %v249 = vmul.f32 %v213, %v221
        %v250 = vmul.f32 %v214, %v221
        %v251 = vmul.f32 %v215, %v221
        %v252 = vmul.f32 %v216, %v221
        %v253 = vmul.f32 %v217, %v221
        %v254 = vadd.f32 %v222, 0.0
        %v255 = vadd.f32 %v223, 0.0
        %v256 = vadd.f32 %v224, 0.0
        %v257 = vadd.f32 %v225, 0.0
        %v258 = vadd.f32 %v226, 0.0
        %v259 = vadd.f32 %v227, 0.0
        %v260 = vadd.f32 %v228, 0.0
        %v261 = vadd.f32 %v229, 0.0
        %v262 = vadd.f32 %v230, 0.0
        %v263 = vadd.f32 %v231, 0.0
        %v264 = vadd.f32 %v232, 0.0
        %v265 = vadd.f32 %v233, 0.0
        %v266 = vadd.f32 %v234, 0.0
        %v267 = vadd.f32 %v235, 0.0
        %v268 = vadd.f32 %v236, 0.0
        %v269 = vadd.f32 %v237, 0.0
        %v270 = vadd.f32 %v238, 0.0
        %v271 = vadd.f32 %v239, 0.0
        %v272 = vadd.f32 %v240, 0.0
        %v273 = vadd.f32 %v241, 0.0
        %v274 = vadd.f32 %v242, 0.0
        %v275 = vadd.f32 %v243, 0.0
        %v276 = vadd.f32 %v244, 0.0
        %v277 = vadd.f32 %v245, 0.0
        %v278 = vadd.f32 %v246, 0.0
        %v279 = vadd.f32 %v247, 0.0
        %v280 = vadd.f32 %v248, 0.0
        %v281 = vadd.f32 %v249, 0.0
        %v282 = vadd.f32 %v250, 0.0
        %v283 = vadd.f32 %v251, 0.0
        %v284 = vadd.f32 %v252, 0.0
        %v285 = vadd.f32 %v253, 0.0
        %v286 = vld [vmem:[%s183 + $0x1] sm:$0xff]
        %v287 = vld [vmem:[%s183 + $0x9] sm:$0xff]
        %v288 = vld [vmem:[%s183 + $0x19] sm:$0xff]
        %v289 = vld [vmem:[%s183 + $0x21] sm:$0xff]
        %v290 = vld [vmem:[%s183 + $0x31] sm:$0xff]
        %v291 = vld [vmem:[%s183 + $0x39] sm:$0xff]
        %v292 = vld [vmem:[%s183 + $0x49] sm:$0xff]
        %v293 = vld [vmem:[%s183 + $0x51] sm:$0xff]
        %v294 = vld [vmem:[%s183 + $0x61] sm:$0xff]
        %v295 = vld [vmem:[%s183 + $0x69] sm:$0xff]
        %v296 = vld [vmem:[%s183 + $0x79] sm:$0xff]
        %v297 = vld [vmem:[%s183 + $0x81] sm:$0xff]
        %v298 = vld [vmem:[%s183 + $0x91] sm:$0xff]
        %v299 = vld [vmem:[%s183 + $0x99] sm:$0xff]
        %v300 = vld [vmem:[%s183 + $0xa9] sm:$0xff]
        %v301 = vld [vmem:[%s183 + $0xb1] sm:$0xff]
        %v302 = vld [vmem:[%s183 + $0xc1] sm:$0xff]
        %v303 = vld [vmem:[%s183 + $0xc9] sm:$0xff]
        %v304 = vld [vmem:[%s183 + $0xd9] sm:$0xff]
        %v305 = vld [vmem:[%s183 + $0xe1] sm:$0xff]
        %v306 = vld [vmem:[%s183 + $0xf1] sm:$0xff]
        %v307 = vld [vmem:[%s183 + $0xf9] sm:$0xff]
        %v308 = vld [vmem:[%s183 + $0x109] sm:$0xff]
        %v309 = vld [vmem:[%s183 + $0x111] sm:$0xff]
        %v310 = vld [vmem:[%s183 + $0x121] sm:$0xff]
        %v311 = vld [vmem:[%s183 + $0x129] sm:$0xff]
        %v312 = vld [vmem:[%s183 + $0x139] sm:$0xff]
        %v313 = vld [vmem:[%s183 + $0x141] sm:$0xff]
        %v314 = vld [vmem:[%s183 + $0x151] sm:$0xff]
        %v315 = vld [vmem:[%s183 + $0x159] sm:$0xff]
        %v316 = vld [vmem:[%s183 + $0x169] sm:$0xff]
        %v317 = vld [vmem:[%s183 + $0x171] sm:$0xff]
        %v318 = vlaneseq
        %v319 = vshrl.u32 %v318, 7
        %v320 = vsub.s32 1, %v319
        %v321 = vrot.slane %v184, %v320
        %v322 = vmul.f32 %v286, %v321
        %v323 = vmul.f32 %v287, %v321
        %v324 = vmul.f32 %v288, %v321
        %v325 = vmul.f32 %v289, %v321
        %v326 = vmul.f32 %v290, %v321
        %v327 = vmul.f32 %v291, %v321
        %v328 = vmul.f32 %v292, %v321
        %v329 = vmul.f32 %v293, %v321
        %v330 = vmul.f32 %v294, %v321
        %v331 = vmul.f32 %v295, %v321
        %v332 = vmul.f32 %v296, %v321
        %v333 = vmul.f32 %v297, %v321
        %v334 = vmul.f32 %v298, %v321
        %v335 = vmul.f32 %v299, %v321
        %v336 = vmul.f32 %v300, %v321
        %v337 = vmul.f32 %v301, %v321
        %v338 = vmul.f32 %v302, %v321
        %v339 = vmul.f32 %v303, %v321
        %v340 = vmul.f32 %v304, %v321
        %v341 = vmul.f32 %v305, %v321
        %v342 = vmul.f32 %v306, %v321
        %v343 = vmul.f32 %v307, %v321
        %v344 = vmul.f32 %v308, %v321
        %v345 = vmul.f32 %v309, %v321
        %v346 = vmul.f32 %v310, %v321
        %v347 = vmul.f32 %v311, %v321
        %v348 = vmul.f32 %v312, %v321
        %v349 = vmul.f32 %v313, %v321
        %v350 = vmul.f32 %v314, %v321
        %v351 = vmul.f32 %v315, %v321
        %v352 = vmul.f32 %v316, %v321
        %v353 = vmul.f32 %v317, %v321
        %v354 = vadd.f32 %v254, %v322
        %v355 = vadd.f32 %v255, %v323
        %v356 = vadd.f32 %v256, %v324
        %v357 = vadd.f32 %v257, %v325
        %v358 = vadd.f32 %v258, %v326
        %v359 = vadd.f32 %v259, %v327
        %v360 = vadd.f32 %v260, %v328
        %v361 = vadd.f32 %v261, %v329
        %v362 = vadd.f32 %v262, %v330
        %v363 = vadd.f32 %v263, %v331
        %v364 = vadd.f32 %v264, %v332
        %v365 = vadd.f32 %v265, %v333
        %v366 = vadd.f32 %v266, %v334
        %v367 = vadd.f32 %v267, %v335
        %v368 = vadd.f32 %v268, %v336
        %v369 = vadd.f32 %v269, %v337
        %v370 = vadd.f32 %v270, %v338
        %v371 = vadd.f32 %v271, %v339
        %v372 = vadd.f32 %v272, %v340
        %v373 = vadd.f32 %v273, %v341
        %v374 = vadd.f32 %v274, %v342
        %v375 = vadd.f32 %v275, %v343
        %v376 = vadd.f32 %v276, %v344
        %v377 = vadd.f32 %v277, %v345
        %v378 = vadd.f32 %v278, %v346
        %v379 = vadd.f32 %v279, %v347
        %v380 = vadd.f32 %v280, %v348
        %v381 = vadd.f32 %v281, %v349
        %v382 = vadd.f32 %v282, %v350
        %v383 = vadd.f32 %v283, %v351
        %v384 = vadd.f32 %v284, %v352
        %v385 = vadd.f32 %v285, %v353
        %v386 = vld [vmem:[%s183 + $0x2] sm:$0xff]
        %v387 = vld [vmem:[%s183 + $0xa] sm:$0xff]
        %v388 = vld [vmem:[%s183 + $0x1a] sm:$0xff]
        %v389 = vld [vmem:[%s183 + $0x22] sm:$0xff]
        %v390 = vld [vmem:[%s183 + $0x32] sm:$0xff]
        %v391 = vld [vmem:[%s183 + $0x3a] sm:$0xff]
        %v392 = vld [vmem:[%s183 + $0x4a] sm:$0xff]
        %v393 = vld [vmem:[%s183 + $0x52] sm:$0xff]
        %v394 = vld [vmem:[%s183 + $0x62] sm:$0xff]
        %v395 = vld [vmem:[%s183 + $0x6a] sm:$0xff]
        %v396 = vld [vmem:[%s183 + $0x7a] sm:$0xff]
        %v397 = vld [vmem:[%s183 + $0x82] sm:$0xff]
        %v398 = vld [vmem:[%s183 + $0x92] sm:$0xff]
        %v399 = vld [vmem:[%s183 + $0x9a] sm:$0xff]
        %v400 = vld [vmem:[%s183 + $0xaa] sm:$0xff]
        %v401 = vld [vmem:[%s183 + $0xb2] sm:$0xff]
        %v402 = vld [vmem:[%s183 + $0xc2] sm:$0xff]
        %v403 = vld [vmem:[%s183 + $0xca] sm:$0xff]
        %v404 = vld [vmem:[%s183 + $0xda] sm:$0xff]
        %v405 = vld [vmem:[%s183 + $0xe2] sm:$0xff]
        %v406 = vld [vmem:[%s183 + $0xf2] sm:$0xff]
        %v407 = vld [vmem:[%s183 + $0xfa] sm:$0xff]
        %v408 = vld [vmem:[%s183 + $0x10a] sm:$0xff]
        %v409 = vld [vmem:[%s183 + $0x112] sm:$0xff]
        %v410 = vld [vmem:[%s183 + $0x122] sm:$0xff]
        %v411 = vld [vmem:[%s183 + $0x12a] sm:$0xff]
        %v412 = vld [vmem:[%s183 + $0x13a] sm:$0xff]
        %v413 = vld [vmem:[%s183 + $0x142] sm:$0xff]
        %v414 = vld [vmem:[%s183 + $0x152] sm:$0xff]
        %v415 = vld [vmem:[%s183 + $0x15a] sm:$0xff]
        %v416 = vld [vmem:[%s183 + $0x16a] sm:$0xff]
        %v417 = vld [vmem:[%s183 + $0x172] sm:$0xff]
        %v418 = vlaneseq
        %v419 = vshrl.u32 %v418, 7
        %v420 = vsub.s32 2, %v419
        %v421 = vrot.slane %v184, %v420
        %v422 = vmul.f32 %v386, %v421
        %v423 = vmul.f32 %v387, %v421
        %v424 = vmul.f32 %v388, %v421
        %v425 = vmul.f32 %v389, %v421
        %v426 = vmul.f32 %v390, %v421
        %v427 = vmul.f32 %v391, %v421
        %v428 = vmul.f32 %v392, %v421
        %v429 = vmul.f32 %v393, %v421
        %v430 = vmul.f32 %v394, %v421
        %v431 = vmul.f32 %v395, %v421
        %v432 = vmul.f32 %v396, %v421
        %v433 = vmul.f32 %v397, %v421
        %v434 = vmul.f32 %v398, %v421
        %v435 = vmul.f32 %v399, %v421
        %v436 = vmul.f32 %v400, %v421
        %v437 = vmul.f32 %v401, %v421
        %v438 = vmul.f32 %v402, %v421
        %v439 = vmul.f32 %v403, %v421
        %v440 = vmul.f32 %v404, %v421
        %v441 = vmul.f32 %v405, %v421
        %v442 = vmul.f32 %v406, %v421
        %v443 = vmul.f32 %v407, %v421
        %v444 = vmul.f32 %v408, %v421
        %v445 = vmul.f32 %v409, %v421
        %v446 = vmul.f32 %v410, %v421
        %v447 = vmul.f32 %v411, %v421
        %v448 = vmul.f32 %v412, %v421
        %v449 = vmul.f32 %v413, %v421
        %v450 = vmul.f32 %v414, %v421
        %v451 = vmul.f32 %v415, %v421
        %v452 = vmul.f32 %v416, %v421
        %v453 = vmul.f32 %v417, %v421
        %v454 = vadd.f32 %v354, %v422
        %v455 = vadd.f32 %v355, %v423
        %v456 = vadd.f32 %v356, %v424
        %v457 = vadd.f32 %v357, %v425
        %v458 = vadd.f32 %v358, %v426
        %v459 = vadd.f32 %v359, %v427
        %v460 = vadd.f32 %v360, %v428
        %v461 = vadd.f32 %v361, %v429
        %v462 = vadd.f32 %v362, %v430
        %v463 = vadd.f32 %v363, %v431
        %v464 = vadd.f32 %v364, %v432
        %v465 = vadd.f32 %v365, %v433
        %v466 = vadd.f32 %v366, %v434
        %v467 = vadd.f32 %v367, %v435
        %v468 = vadd.f32 %v368, %v436
        %v469 = vadd.f32 %v369, %v437
        %v470 = vadd.f32 %v370, %v438
        %v471 = vadd.f32 %v371, %v439
        %v472 = vadd.f32 %v372, %v440
        %v473 = vadd.f32 %v373, %v441
        %v474 = vadd.f32 %v374, %v442
        %v475 = vadd.f32 %v375, %v443
        %v476 = vadd.f32 %v376, %v444
        %v477 = vadd.f32 %v377, %v445
        %v478 = vadd.f32 %v378, %v446
        %v479 = vadd.f32 %v379, %v447
        %v480 = vadd.f32 %v380, %v448
        %v481 = vadd.f32 %v381, %v449
        %v482 = vadd.f32 %v382, %v450
        %v483 = vadd.f32 %v383, %v451
        %v484 = vadd.f32 %v384, %v452
        %v485 = vadd.f32 %v385, %v453
        %v486 = vld [vmem:[%s183 + $0x3] sm:$0xff]
        %v487 = vld [vmem:[%s183 + $0xb] sm:$0xff]
        %v488 = vld [vmem:[%s183 + $0x1b] sm:$0xff]
        %v489 = vld [vmem:[%s183 + $0x23] sm:$0xff]
        %v490 = vld [vmem:[%s183 + $0x33] sm:$0xff]
        %v491 = vld [vmem:[%s183 + $0x3b] sm:$0xff]
        %v492 = vld [vmem:[%s183 + $0x4b] sm:$0xff]
        %v493 = vld [vmem:[%s183 + $0x53] sm:$0xff]
        %v494 = vld [vmem:[%s183 + $0x63] sm:$0xff]
        %v495 = vld [vmem:[%s183 + $0x6b] sm:$0xff]
        %v496 = vld [vmem:[%s183 + $0x7b] sm:$0xff]
        %v497 = vld [vmem:[%s183 + $0x83] sm:$0xff]
        %v498 = vld [vmem:[%s183 + $0x93] sm:$0xff]
        %v499 = vld [vmem:[%s183 + $0x9b] sm:$0xff]
        %v500 = vld [vmem:[%s183 + $0xab] sm:$0xff]
        %v501 = vld [vmem:[%s183 + $0xb3] sm:$0xff]
        %v502 = vld [vmem:[%s183 + $0xc3] sm:$0xff]
        %v503 = vld [vmem:[%s183 + $0xcb] sm:$0xff]
        %v504 = vld [vmem:[%s183 + $0xdb] sm:$0xff]
        %v505 = vld [vmem:[%s183 + $0xe3] sm:$0xff]
        %v506 = vld [vmem:[%s183 + $0xf3] sm:$0xff]
        %v507 = vld [vmem:[%s183 + $0xfb] sm:$0xff]
        %v508 = vld [vmem:[%s183 + $0x10b] sm:$0xff]
        %v509 = vld [vmem:[%s183 + $0x113] sm:$0xff]
        %v510 = vld [vmem:[%s183 + $0x123] sm:$0xff]
        %v511 = vld [vmem:[%s183 + $0x12b] sm:$0xff]
        %v512 = vld [vmem:[%s183 + $0x13b] sm:$0xff]
        %v513 = vld [vmem:[%s183 + $0x143] sm:$0xff]
        %v514 = vld [vmem:[%s183 + $0x153] sm:$0xff]
        %v515 = vld [vmem:[%s183 + $0x15b] sm:$0xff]
        %v516 = vld [vmem:[%s183 + $0x16b] sm:$0xff]
        %v517 = vld [vmem:[%s183 + $0x173] sm:$0xff]
        %v518 = vlaneseq
        %v519 = vshrl.u32 %v518, 7
        %v520 = vsub.s32 3, %v519
        %v521 = vrot.slane %v184, %v520
        %v522 = vmul.f32 %v486, %v521
        %v523 = vmul.f32 %v487, %v521
        %v524 = vmul.f32 %v488, %v521
        %v525 = vmul.f32 %v489, %v521
        %v526 = vmul.f32 %v490, %v521
        %v527 = vmul.f32 %v491, %v521
        %v528 = vmul.f32 %v492, %v521
        %v529 = vmul.f32 %v493, %v521
        %v530 = vmul.f32 %v494, %v521
        %v531 = vmul.f32 %v495, %v521
        %v532 = vmul.f32 %v496, %v521
        %v533 = vmul.f32 %v497, %v521
        %v534 = vmul.f32 %v498, %v521
        %v535 = vmul.f32 %v499, %v521
        %v536 = vmul.f32 %v500, %v521
        %v537 = vmul.f32 %v501, %v521
        %v538 = vmul.f32 %v502, %v521
        %v539 = vmul.f32 %v503, %v521
        %v540 = vmul.f32 %v504, %v521
        %v541 = vmul.f32 %v505, %v521
        %v542 = vmul.f32 %v506, %v521
        %v543 = vmul.f32 %v507, %v521
        %v544 = vmul.f32 %v508, %v521
        %v545 = vmul.f32 %v509, %v521
        %v546 = vmul.f32 %v510, %v521
        %v547 = vmul.f32 %v511, %v521
        %v548 = vmul.f32 %v512, %v521
        %v549 = vmul.f32 %v513, %v521
        %v550 = vmul.f32 %v514, %v521
        %v551 = vmul.f32 %v515, %v521
        %v552 = vmul.f32 %v516, %v521
        %v553 = vmul.f32 %v517, %v521
        %v554 = vadd.f32 %v454, %v522
        %v555 = vadd.f32 %v455, %v523
        %v556 = vadd.f32 %v456, %v524
        %v557 = vadd.f32 %v457, %v525
        %v558 = vadd.f32 %v458, %v526
        %v559 = vadd.f32 %v459, %v527
        %v560 = vadd.f32 %v460, %v528
        %v561 = vadd.f32 %v461, %v529
        %v562 = vadd.f32 %v462, %v530
        %v563 = vadd.f32 %v463, %v531
        %v564 = vadd.f32 %v464, %v532
        %v565 = vadd.f32 %v465, %v533
        %v566 = vadd.f32 %v466, %v534
        %v567 = vadd.f32 %v467, %v535
        %v568 = vadd.f32 %v468, %v536
        %v569 = vadd.f32 %v469, %v537
        %v570 = vadd.f32 %v470, %v538
        %v571 = vadd.f32 %v471, %v539
        %v572 = vadd.f32 %v472, %v540
        %v573 = vadd.f32 %v473, %v541
        %v574 = vadd.f32 %v474, %v542
        %v575 = vadd.f32 %v475, %v543
        %v576 = vadd.f32 %v476, %v544
        %v577 = vadd.f32 %v477, %v545
        %v578 = vadd.f32 %v478, %v546
        %v579 = vadd.f32 %v479, %v547
        %v580 = vadd.f32 %v480, %v548
        %v581 = vadd.f32 %v481, %v549
        %v582 = vadd.f32 %v482, %v550
        %v583 = vadd.f32 %v483, %v551
        %v584 = vadd.f32 %v484, %v552
        %v585 = vadd.f32 %v485, %v553
        %v586 = vld [vmem:[%s183 + $0x4] sm:$0xff]
        %v587 = vld [vmem:[%s183 + $0xc] sm:$0xff]
        %v588 = vld [vmem:[%s183 + $0x1c] sm:$0xff]
        %v589 = vld [vmem:[%s183 + $0x24] sm:$0xff]
        %v590 = vld [vmem:[%s183 + $0x34] sm:$0xff]
        %v591 = vld [vmem:[%s183 + $0x3c] sm:$0xff]
        %v592 = vld [vmem:[%s183 + $0x4c] sm:$0xff]
        %v593 = vld [vmem:[%s183 + $0x54] sm:$0xff]
        %v594 = vld [vmem:[%s183 + $0x64] sm:$0xff]
        %v595 = vld [vmem:[%s183 + $0x6c] sm:$0xff]
        %v596 = vld [vmem:[%s183 + $0x7c] sm:$0xff]
        %v597 = vld [vmem:[%s183 + $0x84] sm:$0xff]
        %v598 = vld [vmem:[%s183 + $0x94] sm:$0xff]
        %v599 = vld [vmem:[%s183 + $0x9c] sm:$0xff]
        %v600 = vld [vmem:[%s183 + $0xac] sm:$0xff]
        %v601 = vld [vmem:[%s183 + $0xb4] sm:$0xff]
        %v602 = vld [vmem:[%s183 + $0xc4] sm:$0xff]
        %v603 = vld [vmem:[%s183 + $0xcc] sm:$0xff]
        %v604 = vld [vmem:[%s183 + $0xdc] sm:$0xff]
        %v605 = vld [vmem:[%s183 + $0xe4] sm:$0xff]
        %v606 = vld [vmem:[%s183 + $0xf4] sm:$0xff]
        %v607 = vld [vmem:[%s183 + $0xfc] sm:$0xff]
        %v608 = vld [vmem:[%s183 + $0x10c] sm:$0xff]
        %v609 = vld [vmem:[%s183 + $0x114] sm:$0xff]
        %v610 = vld [vmem:[%s183 + $0x124] sm:$0xff]
        %v611 = vld [vmem:[%s183 + $0x12c] sm:$0xff]
        %v612 = vld [vmem:[%s183 + $0x13c] sm:$0xff]
        %v613 = vld [vmem:[%s183 + $0x144] sm:$0xff]
        %v614 = vld [vmem:[%s183 + $0x154] sm:$0xff]
        %v615 = vld [vmem:[%s183 + $0x15c] sm:$0xff]
        %v616 = vld [vmem:[%s183 + $0x16c] sm:$0xff]
        %v617 = vld [vmem:[%s183 + $0x174] sm:$0xff]
        %v618 = vlaneseq
        %v619 = vshrl.u32 %v618, 7
        %v620 = vsub.s32 4, %v619
        %v621 = vrot.slane %v184, %v620
        %v622 = vmul.f32 %v586, %v621
        %v623 = vmul.f32 %v587, %v621
        %v624 = vmul.f32 %v588, %v621
        %v625 = vmul.f32 %v589, %v621
        %v626 = vmul.f32 %v590, %v621
        %v627 = vmul.f32 %v591, %v621
        %v628 = vmul.f32 %v592, %v621
        %v629 = vmul.f32 %v593, %v621
        %v630 = vmul.f32 %v594, %v621
        %v631 = vmul.f32 %v595, %v621
        %v632 = vmul.f32 %v596, %v621
        %v633 = vmul.f32 %v597, %v621
        %v634 = vmul.f32 %v598, %v621
        %v635 = vmul.f32 %v599, %v621
        %v636 = vmul.f32 %v600, %v621
        %v637 = vmul.f32 %v601, %v621
        %v638 = vmul.f32 %v602, %v621
        %v639 = vmul.f32 %v603, %v621
        %v640 = vmul.f32 %v604, %v621
        %v641 = vmul.f32 %v605, %v621
        %v642 = vmul.f32 %v606, %v621
        %v643 = vmul.f32 %v607, %v621
        %v644 = vmul.f32 %v608, %v621
        %v645 = vmul.f32 %v609, %v621
        %v646 = vmul.f32 %v610, %v621
        %v647 = vmul.f32 %v611, %v621
        %v648 = vmul.f32 %v612, %v621
        %v649 = vmul.f32 %v613, %v621
        %v650 = vmul.f32 %v614, %v621
        %v651 = vmul.f32 %v615, %v621
        %v652 = vmul.f32 %v616, %v621
        %v653 = vmul.f32 %v617, %v621
        %v654 = vadd.f32 %v554, %v622
        %v655 = vadd.f32 %v555, %v623
        %v656 = vadd.f32 %v556, %v624
        %v657 = vadd.f32 %v557, %v625
        %v658 = vadd.f32 %v558, %v626
        %v659 = vadd.f32 %v559, %v627
        %v660 = vadd.f32 %v560, %v628
        %v661 = vadd.f32 %v561, %v629
        %v662 = vadd.f32 %v562, %v630
        %v663 = vadd.f32 %v563, %v631
        %v664 = vadd.f32 %v564, %v632
        %v665 = vadd.f32 %v565, %v633
        %v666 = vadd.f32 %v566, %v634
        %v667 = vadd.f32 %v567, %v635
        %v668 = vadd.f32 %v568, %v636
        %v669 = vadd.f32 %v569, %v637
        %v670 = vadd.f32 %v570, %v638
        %v671 = vadd.f32 %v571, %v639
        %v672 = vadd.f32 %v572, %v640
        %v673 = vadd.f32 %v573, %v641
        %v674 = vadd.f32 %v574, %v642
        %v675 = vadd.f32 %v575, %v643
        %v676 = vadd.f32 %v576, %v644
        %v677 = vadd.f32 %v577, %v645
        %v678 = vadd.f32 %v578, %v646
        %v679 = vadd.f32 %v579, %v647
        %v680 = vadd.f32 %v580, %v648
        %v681 = vadd.f32 %v581, %v649
        %v682 = vadd.f32 %v582, %v650
        %v683 = vadd.f32 %v583, %v651
        %v684 = vadd.f32 %v584, %v652
        %v685 = vadd.f32 %v585, %v653
        %s686 = scalar_lea.vmem %s183, 24
        %v687 = vld [vmem:[%s686] sm:$0xff]
        %v688 = vld [vmem:[%s686 + $0x8] sm:$0xff]
        %v689 = vld [vmem:[%s686 + $0x18] sm:$0xff]
        %v690 = vld [vmem:[%s686 + $0x20] sm:$0xff]
        %v691 = vld [vmem:[%s686 + $0x30] sm:$0xff]
        %v692 = vld [vmem:[%s686 + $0x38] sm:$0xff]
        %v693 = vld [vmem:[%s686 + $0x48] sm:$0xff]
        %v694 = vld [vmem:[%s686 + $0x50] sm:$0xff]
        %v695 = vld [vmem:[%s686 + $0x60] sm:$0xff]
        %v696 = vld [vmem:[%s686 + $0x68] sm:$0xff]
        %v697 = vld [vmem:[%s686 + $0x78] sm:$0xff]
        %v698 = vld [vmem:[%s686 + $0x80] sm:$0xff]
        %v699 = vld [vmem:[%s686 + $0x90] sm:$0xff]
        %v700 = vld [vmem:[%s686 + $0x98] sm:$0xff]
        %v701 = vld [vmem:[%s686 + $0xa8] sm:$0xff]
        %v702 = vld [vmem:[%s686 + $0xb0] sm:$0xff]
        %v703 = vld [vmem:[%s686 + $0xc0] sm:$0xff]
        %v704 = vld [vmem:[%s686 + $0xc8] sm:$0xff]
        %v705 = vld [vmem:[%s686 + $0xd8] sm:$0xff]
        %v706 = vld [vmem:[%s686 + $0xe0] sm:$0xff]
        %v707 = vld [vmem:[%s686 + $0xf0] sm:$0xff]
        %v708 = vld [vmem:[%s686 + $0xf8] sm:$0xff]
        %v709 = vld [vmem:[%s686 + $0x108] sm:$0xff]
        %v710 = vld [vmem:[%s686 + $0x110] sm:$0xff]
        %v711 = vld [vmem:[%s686 + $0x120] sm:$0xff]
        %v712 = vld [vmem:[%s686 + $0x128] sm:$0xff]
        %v713 = vld [vmem:[%s686 + $0x138] sm:$0xff]
        %v714 = vld [vmem:[%s686 + $0x140] sm:$0xff]
        %v715 = vld [vmem:[%s686 + $0x150] sm:$0xff]
        %v716 = vld [vmem:[%s686 + $0x158] sm:$0xff]
        %v717 = vld [vmem:[%s686 + $0x168] sm:$0xff]
        %v718 = vld [vmem:[%s686 + $0x170] sm:$0xff]
        %v719 = vlaneseq
        %v720 = vshrl.u32 %v719, 7
        %v721 = vsub.s32 5, %v720
        %v722 = vrot.slane %v184, %v721
        %v723 = vmul.f32 %v687, %v722
        %v724 = vmul.f32 %v688, %v722
        %v725 = vmul.f32 %v689, %v722
        %v726 = vmul.f32 %v690, %v722
        %v727 = vmul.f32 %v691, %v722
        %v728 = vmul.f32 %v692, %v722
        %v729 = vmul.f32 %v693, %v722
        %v730 = vmul.f32 %v694, %v722
        %v731 = vmul.f32 %v695, %v722
        %v732 = vmul.f32 %v696, %v722
        %v733 = vmul.f32 %v697, %v722
        %v734 = vmul.f32 %v698, %v722
        %v735 = vmul.f32 %v699, %v722
        %v736 = vmul.f32 %v700, %v722
        %v737 = vmul.f32 %v701, %v722
        %v738 = vmul.f32 %v702, %v722
        %v739 = vmul.f32 %v703, %v722
        %v740 = vmul.f32 %v704, %v722
        %v741 = vmul.f32 %v705, %v722
        %v742 = vmul.f32 %v706, %v722
        %v743 = vmul.f32 %v707, %v722
        %v744 = vmul.f32 %v708, %v722
        %v745 = vmul.f32 %v709, %v722
        %v746 = vmul.f32 %v710, %v722
        %v747 = vmul.f32 %v711, %v722
        %v748 = vmul.f32 %v712, %v722
        %v749 = vmul.f32 %v713, %v722
        %v750 = vmul.f32 %v714, %v722
        %v751 = vmul.f32 %v715, %v722
        %v752 = vmul.f32 %v716, %v722
        %v753 = vmul.f32 %v717, %v722
        %v754 = vmul.f32 %v718, %v722
        %v755 = vadd.f32 %v654, %v723
        %v756 = vadd.f32 %v655, %v724
        %v757 = vadd.f32 %v656, %v725
        %v758 = vadd.f32 %v657, %v726
        %v759 = vadd.f32 %v658, %v727
        %v760 = vadd.f32 %v659, %v728
        %v761 = vadd.f32 %v660, %v729
        %v762 = vadd.f32 %v661, %v730
        %v763 = vadd.f32 %v662, %v731
        %v764 = vadd.f32 %v663, %v732
        %v765 = vadd.f32 %v664, %v733
        %v766 = vadd.f32 %v665, %v734
        %v767 = vadd.f32 %v666, %v735
        %v768 = vadd.f32 %v667, %v736
        %v769 = vadd.f32 %v668, %v737
        %v770 = vadd.f32 %v669, %v738
        %v771 = vadd.f32 %v670, %v739
        %v772 = vadd.f32 %v671, %v740
        %v773 = vadd.f32 %v672, %v741
        %v774 = vadd.f32 %v673, %v742
        %v775 = vadd.f32 %v674, %v743
        %v776 = vadd.f32 %v675, %v744
        %v777 = vadd.f32 %v676, %v745
        %v778 = vadd.f32 %v677, %v746
        %v779 = vadd.f32 %v678, %v747
        %v780 = vadd.f32 %v679, %v748
        %v781 = vadd.f32 %v680, %v749
        %v782 = vadd.f32 %v681, %v750
        %v783 = vadd.f32 %v682, %v751
        %v784 = vadd.f32 %v683, %v752
        %v785 = vadd.f32 %v684, %v753
        %v786 = vadd.f32 %v685, %v754
        %v787 = vld [vmem:[%s686 + $0x1] sm:$0xff]
        %v788 = vld [vmem:[%s686 + $0x9] sm:$0xff]
        %v789 = vld [vmem:[%s686 + $0x19] sm:$0xff]
        %v790 = vld [vmem:[%s686 + $0x21] sm:$0xff]
        %v791 = vld [vmem:[%s686 + $0x31] sm:$0xff]
        %v792 = vld [vmem:[%s686 + $0x39] sm:$0xff]
        %v793 = vld [vmem:[%s686 + $0x49] sm:$0xff]
        %v794 = vld [vmem:[%s686 + $0x51] sm:$0xff]
        %v795 = vld [vmem:[%s686 + $0x61] sm:$0xff]
        %v796 = vld [vmem:[%s686 + $0x69] sm:$0xff]
        %v797 = vld [vmem:[%s686 + $0x79] sm:$0xff]
        %v798 = vld [vmem:[%s686 + $0x81] sm:$0xff]
        %v799 = vld [vmem:[%s686 + $0x91] sm:$0xff]
        %v800 = vld [vmem:[%s686 + $0x99] sm:$0xff]
        %v801 = vld [vmem:[%s686 + $0xa9] sm:$0xff]
        %v802 = vld [vmem:[%s686 + $0xb1] sm:$0xff]
        %v803 = vld [vmem:[%s686 + $0xc1] sm:$0xff]
        %v804 = vld [vmem:[%s686 + $0xc9] sm:$0xff]
        %v805 = vld [vmem:[%s686 + $0xd9] sm:$0xff]
        %v806 = vld [vmem:[%s686 + $0xe1] sm:$0xff]
        %v807 = vld [vmem:[%s686 + $0xf1] sm:$0xff]
        %v808 = vld [vmem:[%s686 + $0xf9] sm:$0xff]
        %v809 = vld [vmem:[%s686 + $0x109] sm:$0xff]
        %v810 = vld [vmem:[%s686 + $0x111] sm:$0xff]
        %v811 = vld [vmem:[%s686 + $0x121] sm:$0xff]
        %v812 = vld [vmem:[%s686 + $0x129] sm:$0xff]
        %v813 = vld [vmem:[%s686 + $0x139] sm:$0xff]
        %v814 = vld [vmem:[%s686 + $0x141] sm:$0xff]
        %v815 = vld [vmem:[%s686 + $0x151] sm:$0xff]
        %v816 = vld [vmem:[%s686 + $0x159] sm:$0xff]
        %v817 = vld [vmem:[%s686 + $0x169] sm:$0xff]
        %v818 = vld [vmem:[%s686 + $0x171] sm:$0xff]
        %v819 = vlaneseq
        %v820 = vshrl.u32 %v819, 7
        %v821 = vsub.s32 6, %v820
        %v822 = vrot.slane %v184, %v821
        %v823 = vmul.f32 %v787, %v822
        %v824 = vmul.f32 %v788, %v822
        %v825 = vmul.f32 %v789, %v822
        %v826 = vmul.f32 %v790, %v822
        %v827 = vmul.f32 %v791, %v822
        %v828 = vmul.f32 %v792, %v822
        %v829 = vmul.f32 %v793, %v822
        %v830 = vmul.f32 %v794, %v822
        %v831 = vmul.f32 %v795, %v822
        %v832 = vmul.f32 %v796, %v822
        %v833 = vmul.f32 %v797, %v822
        %v834 = vmul.f32 %v798, %v822
        %v835 = vmul.f32 %v799, %v822
        %v836 = vmul.f32 %v800, %v822
        %v837 = vmul.f32 %v801, %v822
        %v838 = vmul.f32 %v802, %v822
        %v839 = vmul.f32 %v803, %v822
        %v840 = vmul.f32 %v804, %v822
        %v841 = vmul.f32 %v805, %v822
        %v842 = vmul.f32 %v806, %v822
        %v843 = vmul.f32 %v807, %v822
        %v844 = vmul.f32 %v808, %v822
        %v845 = vmul.f32 %v809, %v822
        %v846 = vmul.f32 %v810, %v822
        %v847 = vmul.f32 %v811, %v822
        %v848 = vmul.f32 %v812, %v822
        %v849 = vmul.f32 %v813, %v822
        %v850 = vmul.f32 %v814, %v822
        %v851 = vmul.f32 %v815, %v822
        %v852 = vmul.f32 %v816, %v822
        %v853 = vmul.f32 %v817, %v822
        %v854 = vmul.f32 %v818, %v822
        %v855 = vadd.f32 %v755, %v823
        %v856 = vadd.f32 %v756, %v824
        %v857 = vadd.f32 %v757, %v825
        %v858 = vadd.f32 %v758, %v826
        %v859 = vadd.f32 %v759, %v827
        %v860 = vadd.f32 %v760, %v828
        %v861 = vadd.f32 %v761, %v829
        %v862 = vadd.f32 %v762, %v830
        %v863 = vadd.f32 %v763, %v831
        %v864 = vadd.f32 %v764, %v832
        %v865 = vadd.f32 %v765, %v833
        %v866 = vadd.f32 %v766, %v834
        %v867 = vadd.f32 %v767, %v835
        %v868 = vadd.f32 %v768, %v836
        %v869 = vadd.f32 %v769, %v837
        %v870 = vadd.f32 %v770, %v838
        %v871 = vadd.f32 %v771, %v839
        %v872 = vadd.f32 %v772, %v840
        %v873 = vadd.f32 %v773, %v841
        %v874 = vadd.f32 %v774, %v842
        %v875 = vadd.f32 %v775, %v843
        %v876 = vadd.f32 %v776, %v844
        %v877 = vadd.f32 %v777, %v845
        %v878 = vadd.f32 %v778, %v846
        %v879 = vadd.f32 %v779, %v847
        %v880 = vadd.f32 %v780, %v848
        %v881 = vadd.f32 %v781, %v849
        %v882 = vadd.f32 %v782, %v850
        %v883 = vadd.f32 %v783, %v851
        %v884 = vadd.f32 %v784, %v852
        %v885 = vadd.f32 %v785, %v853
        %v886 = vadd.f32 %v786, %v854
        %v887 = vld [vmem:[%s686 + $0x2] sm:$0xff]
        %v888 = vld [vmem:[%s686 + $0xa] sm:$0xff]
        %v889 = vld [vmem:[%s686 + $0x1a] sm:$0xff]
        %v890 = vld [vmem:[%s686 + $0x22] sm:$0xff]
        %v891 = vld [vmem:[%s686 + $0x32] sm:$0xff]
        %v892 = vld [vmem:[%s686 + $0x3a] sm:$0xff]
        %v893 = vld [vmem:[%s686 + $0x4a] sm:$0xff]
        %v894 = vld [vmem:[%s686 + $0x52] sm:$0xff]
        %v895 = vld [vmem:[%s686 + $0x62] sm:$0xff]
        %v896 = vld [vmem:[%s686 + $0x6a] sm:$0xff]
        %v897 = vld [vmem:[%s686 + $0x7a] sm:$0xff]
        %v898 = vld [vmem:[%s686 + $0x82] sm:$0xff]
        %v899 = vld [vmem:[%s686 + $0x92] sm:$0xff]
        %v900 = vld [vmem:[%s686 + $0x9a] sm:$0xff]
        %v901 = vld [vmem:[%s686 + $0xaa] sm:$0xff]
        %v902 = vld [vmem:[%s686 + $0xb2] sm:$0xff]
        %v903 = vld [vmem:[%s686 + $0xc2] sm:$0xff]
        %v904 = vld [vmem:[%s686 + $0xca] sm:$0xff]
        %v905 = vld [vmem:[%s686 + $0xda] sm:$0xff]
        %v906 = vld [vmem:[%s686 + $0xe2] sm:$0xff]
        %v907 = vld [vmem:[%s686 + $0xf2] sm:$0xff]
        %v908 = vld [vmem:[%s686 + $0xfa] sm:$0xff]
        %v909 = vld [vmem:[%s686 + $0x10a] sm:$0xff]
        %v910 = vld [vmem:[%s686 + $0x112] sm:$0xff]
        %v911 = vld [vmem:[%s686 + $0x122] sm:$0xff]
        %v912 = vld [vmem:[%s686 + $0x12a] sm:$0xff]
        %v913 = vld [vmem:[%s686 + $0x13a] sm:$0xff]
        %v914 = vld [vmem:[%s686 + $0x142] sm:$0xff]
        %v915 = vld [vmem:[%s686 + $0x152] sm:$0xff]
        %v916 = vld [vmem:[%s686 + $0x15a] sm:$0xff]
        %v917 = vld [vmem:[%s686 + $0x16a] sm:$0xff]
        %v918 = vld [vmem:[%s686 + $0x172] sm:$0xff]
        %v919 = vlaneseq
        %v920 = vshrl.u32 %v919, 7
        %v921 = vsub.s32 7, %v920
        %v922 = vrot.slane %v184, %v921
        %v923 = vmul.f32 %v887, %v922
        %v924 = vmul.f32 %v888, %v922
        %v925 = vmul.f32 %v889, %v922
        %v926 = vmul.f32 %v890, %v922
        %v927 = vmul.f32 %v891, %v922
        %v928 = vmul.f32 %v892, %v922
        %v929 = vmul.f32 %v893, %v922
        %v930 = vmul.f32 %v894, %v922
        %v931 = vmul.f32 %v895, %v922
        %v932 = vmul.f32 %v896, %v922
        %v933 = vmul.f32 %v897, %v922
        %v934 = vmul.f32 %v898, %v922
        %v935 = vmul.f32 %v899, %v922
        %v936 = vmul.f32 %v900, %v922
        %v937 = vmul.f32 %v901, %v922
        %v938 = vmul.f32 %v902, %v922
        %v939 = vmul.f32 %v903, %v922
        %v940 = vmul.f32 %v904, %v922
        %v941 = vmul.f32 %v905, %v922
        %v942 = vmul.f32 %v906, %v922
        %v943 = vmul.f32 %v907, %v922
        %v944 = vmul.f32 %v908, %v922
        %v945 = vmul.f32 %v909, %v922
        %v946 = vmul.f32 %v910, %v922
        %v947 = vmul.f32 %v911, %v922
        %v948 = vmul.f32 %v912, %v922
        %v949 = vmul.f32 %v913, %v922
        %v950 = vmul.f32 %v914, %v922
        %v951 = vmul.f32 %v915, %v922
        %v952 = vmul.f32 %v916, %v922
        %v953 = vmul.f32 %v917, %v922
        %v954 = vmul.f32 %v918, %v922
        %v955 = vadd.f32 %v855, %v923
        %v956 = vadd.f32 %v856, %v924
        %v957 = vadd.f32 %v857, %v925
        %v958 = vadd.f32 %v858, %v926
        %v959 = vadd.f32 %v859, %v927
        %v960 = vadd.f32 %v860, %v928
        %v961 = vadd.f32 %v861, %v929
        %v962 = vadd.f32 %v862, %v930
        %v963 = vadd.f32 %v863, %v931
        %v964 = vadd.f32 %v864, %v932
        %v965 = vadd.f32 %v865, %v933
        %v966 = vadd.f32 %v866, %v934
        %v967 = vadd.f32 %v867, %v935
        %v968 = vadd.f32 %v868, %v936
        %v969 = vadd.f32 %v869, %v937
        %v970 = vadd.f32 %v870, %v938
        %v971 = vadd.f32 %v871, %v939
        %v972 = vadd.f32 %v872, %v940
        %v973 = vadd.f32 %v873, %v941
        %v974 = vadd.f32 %v874, %v942
        %v975 = vadd.f32 %v875, %v943
        %v976 = vadd.f32 %v876, %v944
        %v977 = vadd.f32 %v877, %v945
        %v978 = vadd.f32 %v878, %v946
        %v979 = vadd.f32 %v879, %v947
        %v980 = vadd.f32 %v880, %v948
        %v981 = vadd.f32 %v881, %v949
        %v982 = vadd.f32 %v882, %v950
        %v983 = vadd.f32 %v883, %v951
        %v984 = vadd.f32 %v884, %v952
        %v985 = vadd.f32 %v885, %v953
        %v986 = vadd.f32 %v886, %v954
        %v987 = vld [vmem:[%s686 + $0x3] sm:$0xff]
        %v988 = vld [vmem:[%s686 + $0xb] sm:$0xff]
        %v989 = vld [vmem:[%s686 + $0x1b] sm:$0xff]
        %v990 = vld [vmem:[%s686 + $0x23] sm:$0xff]
        %v991 = vld [vmem:[%s686 + $0x33] sm:$0xff]
        %v992 = vld [vmem:[%s686 + $0x3b] sm:$0xff]
        %v993 = vld [vmem:[%s686 + $0x4b] sm:$0xff]
        %v994 = vld [vmem:[%s686 + $0x53] sm:$0xff]
        %v995 = vld [vmem:[%s686 + $0x63] sm:$0xff]
        %v996 = vld [vmem:[%s686 + $0x6b] sm:$0xff]
        %v997 = vld [vmem:[%s686 + $0x7b] sm:$0xff]
        %v998 = vld [vmem:[%s686 + $0x83] sm:$0xff]
        %v999 = vld [vmem:[%s686 + $0x93] sm:$0xff]
        %v1000 = vld [vmem:[%s686 + $0x9b] sm:$0xff]
        %v1001 = vld [vmem:[%s686 + $0xab] sm:$0xff]
        %v1002 = vld [vmem:[%s686 + $0xb3] sm:$0xff]
        %v1003 = vld [vmem:[%s686 + $0xc3] sm:$0xff]
        %v1004 = vld [vmem:[%s686 + $0xcb] sm:$0xff]
        %v1005 = vld [vmem:[%s686 + $0xdb] sm:$0xff]
        %v1006 = vld [vmem:[%s686 + $0xe3] sm:$0xff]
        %v1007 = vld [vmem:[%s686 + $0xf3] sm:$0xff]
        %v1008 = vld [vmem:[%s686 + $0xfb] sm:$0xff]
        %v1009 = vld [vmem:[%s686 + $0x10b] sm:$0xff]
        %v1010 = vld [vmem:[%s686 + $0x113] sm:$0xff]
        %v1011 = vld [vmem:[%s686 + $0x123] sm:$0xff]
        %v1012 = vld [vmem:[%s686 + $0x12b] sm:$0xff]
        %v1013 = vld [vmem:[%s686 + $0x13b] sm:$0xff]
        %v1014 = vld [vmem:[%s686 + $0x143] sm:$0xff]
        %v1015 = vld [vmem:[%s686 + $0x153] sm:$0xff]
        %v1016 = vld [vmem:[%s686 + $0x15b] sm:$0xff]
        %v1017 = vld [vmem:[%s686 + $0x16b] sm:$0xff]
        %v1018 = vld [vmem:[%s686 + $0x173] sm:$0xff]
        %v1019 = vlaneseq
        %v1020 = vshrl.u32 %v1019, 7
        %v1021 = vsub.s32 0, %v1020
        %v1022 = vrot.slane %v185, %v1021
        %v1023 = vmul.f32 %v987, %v1022
        %v1024 = vmul.f32 %v988, %v1022
        %v1025 = vmul.f32 %v989, %v1022
        %v1026 = vmul.f32 %v990, %v1022
        %v1027 = vmul.f32 %v991, %v1022
        %v1028 = vmul.f32 %v992, %v1022
        %v1029 = vmul.f32 %v993, %v1022
        %v1030 = vmul.f32 %v994, %v1022
        %v1031 = vmul.f32 %v995, %v1022
        %v1032 = vmul.f32 %v996, %v1022
        %v1033 = vmul.f32 %v997, %v1022
        %v1034 = vmul.f32 %v998, %v1022
        %v1035 = vmul.f32 %v999, %v1022
        %v1036 = vmul.f32 %v1000, %v1022
        %v1037 = vmul.f32 %v1001, %v1022
        %v1038 = vmul.f32 %v1002, %v1022
        %v1039 = vmul.f32 %v1003, %v1022
        %v1040 = vmul.f32 %v1004, %v1022
        %v1041 = vmul.f32 %v1005, %v1022
        %v1042 = vmul.f32 %v1006, %v1022
        %v1043 = vmul.f32 %v1007, %v1022
        %v1044 = vmul.f32 %v1008, %v1022
        %v1045 = vmul.f32 %v1009, %v1022
        %v1046 = vmul.f32 %v1010, %v1022
        %v1047 = vmul.f32 %v1011, %v1022
        %v1048 = vmul.f32 %v1012, %v1022
        %v1049 = vmul.f32 %v1013, %v1022
        %v1050 = vmul.f32 %v1014, %v1022
        %v1051 = vmul.f32 %v1015, %v1022
        %v1052 = vmul.f32 %v1016, %v1022
        %v1053 = vmul.f32 %v1017, %v1022
        %v1054 = vmul.f32 %v1018, %v1022
        %v1055 = vadd.f32 %v955, %v1023
        %v1056 = vadd.f32 %v956, %v1024
        %v1057 = vadd.f32 %v957, %v1025
        %v1058 = vadd.f32 %v958, %v1026
        %v1059 = vadd.f32 %v959, %v1027
        %v1060 = vadd.f32 %v960, %v1028
        %v1061 = vadd.f32 %v961, %v1029
        %v1062 = vadd.f32 %v962, %v1030
        %v1063 = vadd.f32 %v963, %v1031
        %v1064 = vadd.f32 %v964, %v1032
        %v1065 = vadd.f32 %v965, %v1033
        %v1066 = vadd.f32 %v966, %v1034
        %v1067 = vadd.f32 %v967, %v1035
        %v1068 = vadd.f32 %v968, %v1036
        %v1069 = vadd.f32 %v969, %v1037
        %v1070 = vadd.f32 %v970, %v1038
        %v1071 = vadd.f32 %v971, %v1039
        %v1072 = vadd.f32 %v972, %v1040
        %v1073 = vadd.f32 %v973, %v1041
        %v1074 = vadd.f32 %v974, %v1042
        %v1075 = vadd.f32 %v975, %v1043
        %v1076 = vadd.f32 %v976, %v1044
        %v1077 = vadd.f32 %v977, %v1045
        %v1078 = vadd.f32 %v978, %v1046
        %v1079 = vadd.f32 %v979, %v1047
        %v1080 = vadd.f32 %v980, %v1048
        %v1081 = vadd.f32 %v981, %v1049
        %v1082 = vadd.f32 %v982, %v1050
        %v1083 = vadd.f32 %v983, %v1051
        %v1084 = vadd.f32 %v984, %v1052
        %v1085 = vadd.f32 %v985, %v1053
        %v1086 = vadd.f32 %v986, %v1054
        %v1087 = vld [vmem:[%s686 + $0x4] sm:$0xff]
        %v1088 = vld [vmem:[%s686 + $0xc] sm:$0xff]
        %v1089 = vld [vmem:[%s686 + $0x1c] sm:$0xff]
        %v1090 = vld [vmem:[%s686 + $0x24] sm:$0xff]
        %v1091 = vld [vmem:[%s686 + $0x34] sm:$0xff]
        %v1092 = vld [vmem:[%s686 + $0x3c] sm:$0xff]
        %v1093 = vld [vmem:[%s686 + $0x4c] sm:$0xff]
        %v1094 = vld [vmem:[%s686 + $0x54] sm:$0xff]
        %v1095 = vld [vmem:[%s686 + $0x64] sm:$0xff]
        %v1096 = vld [vmem:[%s686 + $0x6c] sm:$0xff]
        %v1097 = vld [vmem:[%s686 + $0x7c] sm:$0xff]
        %v1098 = vld [vmem:[%s686 + $0x84] sm:$0xff]
        %v1099 = vld [vmem:[%s686 + $0x94] sm:$0xff]
        %v1100 = vld [vmem:[%s686 + $0x9c] sm:$0xff]
        %v1101 = vld [vmem:[%s686 + $0xac] sm:$0xff]
        %v1102 = vld [vmem:[%s686 + $0xb4] sm:$0xff]
        %v1103 = vld [vmem:[%s686 + $0xc4] sm:$0xff]
        %v1104 = vld [vmem:[%s686 + $0xcc] sm:$0xff]
        %v1105 = vld [vmem:[%s686 + $0xdc] sm:$0xff]
        %v1106 = vld [vmem:[%s686 + $0xe4] sm:$0xff]
        %v1107 = vld [vmem:[%s686 + $0xf4] sm:$0xff]
        %v1108 = vld [vmem:[%s686 + $0xfc] sm:$0xff]
        %v1109 = vld [vmem:[%s686 + $0x10c] sm:$0xff]
        %v1110 = vld [vmem:[%s686 + $0x114] sm:$0xff]
        %v1111 = vld [vmem:[%s686 + $0x124] sm:$0xff]
        %v1112 = vld [vmem:[%s686 + $0x12c] sm:$0xff]
        %v1113 = vld [vmem:[%s686 + $0x13c] sm:$0xff]
        %v1114 = vld [vmem:[%s686 + $0x144] sm:$0xff]
        %v1115 = vld [vmem:[%s686 + $0x154] sm:$0xff]
        %v1116 = vld [vmem:[%s686 + $0x15c] sm:$0xff]
        %v1117 = vld [vmem:[%s686 + $0x16c] sm:$0xff]
        %v1118 = vld [vmem:[%s686 + $0x174] sm:$0xff]
        %v1119 = vlaneseq
        %v1120 = vshrl.u32 %v1119, 7
        %v1121 = vsub.s32 1, %v1120
        %v1122 = vrot.slane %v185, %v1121
        %v1123 = vmul.f32 %v1087, %v1122
        %v1124 = vmul.f32 %v1088, %v1122
        %v1125 = vmul.f32 %v1089, %v1122
        %v1126 = vmul.f32 %v1090, %v1122
        %v1127 = vmul.f32 %v1091, %v1122
        %v1128 = vmul.f32 %v1092, %v1122
        %v1129 = vmul.f32 %v1093, %v1122
        %v1130 = vmul.f32 %v1094, %v1122
        %v1131 = vmul.f32 %v1095, %v1122
        %v1132 = vmul.f32 %v1096, %v1122
        %v1133 = vmul.f32 %v1097, %v1122
        %v1134 = vmul.f32 %v1098, %v1122
        %v1135 = vmul.f32 %v1099, %v1122
        %v1136 = vmul.f32 %v1100, %v1122
        %v1137 = vmul.f32 %v1101, %v1122
        %v1138 = vmul.f32 %v1102, %v1122
        %v1139 = vmul.f32 %v1103, %v1122
        %v1140 = vmul.f32 %v1104, %v1122
        %v1141 = vmul.f32 %v1105, %v1122
        %v1142 = vmul.f32 %v1106, %v1122
        %v1143 = vmul.f32 %v1107, %v1122
        %v1144 = vmul.f32 %v1108, %v1122
        %v1145 = vmul.f32 %v1109, %v1122
        %v1146 = vmul.f32 %v1110, %v1122
        %v1147 = vmul.f32 %v1111, %v1122
        %v1148 = vmul.f32 %v1112, %v1122
        %v1149 = vmul.f32 %v1113, %v1122
        %v1150 = vmul.f32 %v1114, %v1122
        %v1151 = vmul.f32 %v1115, %v1122
        %v1152 = vmul.f32 %v1116, %v1122
        %v1153 = vmul.f32 %v1117, %v1122
        %v1154 = vmul.f32 %v1118, %v1122
        %v1155 = vadd.f32 %v1055, %v1123
        %v1156 = vadd.f32 %v1056, %v1124
        %v1157 = vadd.f32 %v1057, %v1125
        %v1158 = vadd.f32 %v1058, %v1126
        %v1159 = vadd.f32 %v1059, %v1127
        %v1160 = vadd.f32 %v1060, %v1128
        %v1161 = vadd.f32 %v1061, %v1129
        %v1162 = vadd.f32 %v1062, %v1130
        %v1163 = vadd.f32 %v1063, %v1131
        %v1164 = vadd.f32 %v1064, %v1132
        %v1165 = vadd.f32 %v1065, %v1133
        %v1166 = vadd.f32 %v1066, %v1134
        %v1167 = vadd.f32 %v1067, %v1135
        %v1168 = vadd.f32 %v1068, %v1136
        %v1169 = vadd.f32 %v1069, %v1137
        %v1170 = vadd.f32 %v1070, %v1138
        %v1171 = vadd.f32 %v1071, %v1139
        %v1172 = vadd.f32 %v1072, %v1140
        %v1173 = vadd.f32 %v1073, %v1141
        %v1174 = vadd.f32 %v1074, %v1142
        %v1175 = vadd.f32 %v1075, %v1143
        %v1176 = vadd.f32 %v1076, %v1144
        %v1177 = vadd.f32 %v1077, %v1145
        %v1178 = vadd.f32 %v1078, %v1146
        %v1179 = vadd.f32 %v1079, %v1147
        %v1180 = vadd.f32 %v1080, %v1148
        %v1181 = vadd.f32 %v1081, %v1149
        %v1182 = vadd.f32 %v1082, %v1150
        %v1183 = vadd.f32 %v1083, %v1151
        %v1184 = vadd.f32 %v1084, %v1152
        %v1185 = vadd.f32 %v1085, %v1153
        %v1186 = vadd.f32 %v1086, %v1154
        %s1187 = scalar_lea.vmem %s183, 48
        %v1188 = vld [vmem:[%s1187] sm:$0xff]
        %v1189 = vld [vmem:[%s1187 + $0x8] sm:$0xff]
        %v1190 = vld [vmem:[%s1187 + $0x18] sm:$0xff]
        %v1191 = vld [vmem:[%s1187 + $0x20] sm:$0xff]
        %v1192 = vld [vmem:[%s1187 + $0x30] sm:$0xff]
        %v1193 = vld [vmem:[%s1187 + $0x38] sm:$0xff]
        %v1194 = vld [vmem:[%s1187 + $0x48] sm:$0xff]
        %v1195 = vld [vmem:[%s1187 + $0x50] sm:$0xff]
        %v1196 = vld [vmem:[%s1187 + $0x60] sm:$0xff]
        %v1197 = vld [vmem:[%s1187 + $0x68] sm:$0xff]
        %v1198 = vld [vmem:[%s1187 + $0x78] sm:$0xff]
        %v1199 = vld [vmem:[%s1187 + $0x80] sm:$0xff]
        %v1200 = vld [vmem:[%s1187 + $0x90] sm:$0xff]
        %v1201 = vld [vmem:[%s1187 + $0x98] sm:$0xff]
        %v1202 = vld [vmem:[%s1187 + $0xa8] sm:$0xff]
        %v1203 = vld [vmem:[%s1187 + $0xb0] sm:$0xff]
        %v1204 = vld [vmem:[%s1187 + $0xc0] sm:$0xff]
        %v1205 = vld [vmem:[%s1187 + $0xc8] sm:$0xff]
        %v1206 = vld [vmem:[%s1187 + $0xd8] sm:$0xff]
        %v1207 = vld [vmem:[%s1187 + $0xe0] sm:$0xff]
        %v1208 = vld [vmem:[%s1187 + $0xf0] sm:$0xff]
        %v1209 = vld [vmem:[%s1187 + $0xf8] sm:$0xff]
        %v1210 = vld [vmem:[%s1187 + $0x108] sm:$0xff]
        %v1211 = vld [vmem:[%s1187 + $0x110] sm:$0xff]
        %v1212 = vld [vmem:[%s1187 + $0x120] sm:$0xff]
        %v1213 = vld [vmem:[%s1187 + $0x128] sm:$0xff]
        %v1214 = vld [vmem:[%s1187 + $0x138] sm:$0xff]
        %v1215 = vld [vmem:[%s1187 + $0x140] sm:$0xff]
        %v1216 = vld [vmem:[%s1187 + $0x150] sm:$0xff]
        %v1217 = vld [vmem:[%s1187 + $0x158] sm:$0xff]
        %v1218 = vld [vmem:[%s1187 + $0x168] sm:$0xff]
        %v1219 = vld [vmem:[%s1187 + $0x170] sm:$0xff]
        %v1220 = vlaneseq
        %v1221 = vshrl.u32 %v1220, 7
        %v1222 = vsub.s32 2, %v1221
        %v1223 = vrot.slane %v185, %v1222
        %v1224 = vmul.f32 %v1188, %v1223
        %v1225 = vmul.f32 %v1189, %v1223
        %v1226 = vmul.f32 %v1190, %v1223
        %v1227 = vmul.f32 %v1191, %v1223
        %v1228 = vmul.f32 %v1192, %v1223
        %v1229 = vmul.f32 %v1193, %v1223
        %v1230 = vmul.f32 %v1194, %v1223
        %v1231 = vmul.f32 %v1195, %v1223
        %v1232 = vmul.f32 %v1196, %v1223
        %v1233 = vmul.f32 %v1197, %v1223
        %v1234 = vmul.f32 %v1198, %v1223
        %v1235 = vmul.f32 %v1199, %v1223
        %v1236 = vmul.f32 %v1200, %v1223
        %v1237 = vmul.f32 %v1201, %v1223
        %v1238 = vmul.f32 %v1202, %v1223
        %v1239 = vmul.f32 %v1203, %v1223
        %v1240 = vmul.f32 %v1204, %v1223
        %v1241 = vmul.f32 %v1205, %v1223
        %v1242 = vmul.f32 %v1206, %v1223
        %v1243 = vmul.f32 %v1207, %v1223
        %v1244 = vmul.f32 %v1208, %v1223
        %v1245 = vmul.f32 %v1209, %v1223
        %v1246 = vmul.f32 %v1210, %v1223
        %v1247 = vmul.f32 %v1211, %v1223
        %v1248 = vmul.f32 %v1212, %v1223
        %v1249 = vmul.f32 %v1213, %v1223
        %v1250 = vmul.f32 %v1214, %v1223
        %v1251 = vmul.f32 %v1215, %v1223
        %v1252 = vmul.f32 %v1216, %v1223
        %v1253 = vmul.f32 %v1217, %v1223
        %v1254 = vmul.f32 %v1218, %v1223
        %v1255 = vmul.f32 %v1219, %v1223
        %v1256 = vadd.f32 %v1155, %v1224
        %v1257 = vadd.f32 %v1156, %v1225
        %v1258 = vadd.f32 %v1157, %v1226
        %v1259 = vadd.f32 %v1158, %v1227
        %v1260 = vadd.f32 %v1159, %v1228
        %v1261 = vadd.f32 %v1160, %v1229
        %v1262 = vadd.f32 %v1161, %v1230
        %v1263 = vadd.f32 %v1162, %v1231
        %v1264 = vadd.f32 %v1163, %v1232
        %v1265 = vadd.f32 %v1164, %v1233
        %v1266 = vadd.f32 %v1165, %v1234
        %v1267 = vadd.f32 %v1166, %v1235
        %v1268 = vadd.f32 %v1167, %v1236
        %v1269 = vadd.f32 %v1168, %v1237
        %v1270 = vadd.f32 %v1169, %v1238
        %v1271 = vadd.f32 %v1170, %v1239
        %v1272 = vadd.f32 %v1171, %v1240
        %v1273 = vadd.f32 %v1172, %v1241
        %v1274 = vadd.f32 %v1173, %v1242
        %v1275 = vadd.f32 %v1174, %v1243
        %v1276 = vadd.f32 %v1175, %v1244
        %v1277 = vadd.f32 %v1176, %v1245
        %v1278 = vadd.f32 %v1177, %v1246
        %v1279 = vadd.f32 %v1178, %v1247
        %v1280 = vadd.f32 %v1179, %v1248
        %v1281 = vadd.f32 %v1180, %v1249
        %v1282 = vadd.f32 %v1181, %v1250
        %v1283 = vadd.f32 %v1182, %v1251
        %v1284 = vadd.f32 %v1183, %v1252
        %v1285 = vadd.f32 %v1184, %v1253
        %v1286 = vadd.f32 %v1185, %v1254
        %v1287 = vadd.f32 %v1186, %v1255
        %v1288 = vld [vmem:[%s1187 + $0x1] sm:$0xff]
        %v1289 = vld [vmem:[%s1187 + $0x9] sm:$0xff]
        %v1290 = vld [vmem:[%s1187 + $0x19] sm:$0xff]
        %v1291 = vld [vmem:[%s1187 + $0x21] sm:$0xff]
        %v1292 = vld [vmem:[%s1187 + $0x31] sm:$0xff]
        %v1293 = vld [vmem:[%s1187 + $0x39] sm:$0xff]
        %v1294 = vld [vmem:[%s1187 + $0x49] sm:$0xff]
        %v1295 = vld [vmem:[%s1187 + $0x51] sm:$0xff]
        %v1296 = vld [vmem:[%s1187 + $0x61] sm:$0xff]
        %v1297 = vld [vmem:[%s1187 + $0x69] sm:$0xff]
        %v1298 = vld [vmem:[%s1187 + $0x79] sm:$0xff]
        %v1299 = vld [vmem:[%s1187 + $0x81] sm:$0xff]
        %v1300 = vld [vmem:[%s1187 + $0x91] sm:$0xff]
        %v1301 = vld [vmem:[%s1187 + $0x99] sm:$0xff]
        %v1302 = vld [vmem:[%s1187 + $0xa9] sm:$0xff]
        %v1303 = vld [vmem:[%s1187 + $0xb1] sm:$0xff]
        %v1304 = vld [vmem:[%s1187 + $0xc1] sm:$0xff]
        %v1305 = vld [vmem:[%s1187 + $0xc9] sm:$0xff]
        %v1306 = vld [vmem:[%s1187 + $0xd9] sm:$0xff]
        %v1307 = vld [vmem:[%s1187 + $0xe1] sm:$0xff]
        %v1308 = vld [vmem:[%s1187 + $0xf1] sm:$0xff]
        %v1309 = vld [vmem:[%s1187 + $0xf9] sm:$0xff]
        %v1310 = vld [vmem:[%s1187 + $0x109] sm:$0xff]
        %v1311 = vld [vmem:[%s1187 + $0x111] sm:$0xff]
        %v1312 = vld [vmem:[%s1187 + $0x121] sm:$0xff]
        %v1313 = vld [vmem:[%s1187 + $0x129] sm:$0xff]
        %v1314 = vld [vmem:[%s1187 + $0x139] sm:$0xff]
        %v1315 = vld [vmem:[%s1187 + $0x141] sm:$0xff]
        %v1316 = vld [vmem:[%s1187 + $0x151] sm:$0xff]
        %v1317 = vld [vmem:[%s1187 + $0x159] sm:$0xff]
        %v1318 = vld [vmem:[%s1187 + $0x169] sm:$0xff]
        %v1319 = vld [vmem:[%s1187 + $0x171] sm:$0xff]
        %v1320 = vlaneseq
        %v1321 = vshrl.u32 %v1320, 7
        %v1322 = vsub.s32 3, %v1321
        %v1323 = vrot.slane %v185, %v1322
        %v1324 = vmul.f32 %v1288, %v1323
        %v1325 = vmul.f32 %v1289, %v1323
        %v1326 = vmul.f32 %v1290, %v1323
        %v1327 = vmul.f32 %v1291, %v1323
        %v1328 = vmul.f32 %v1292, %v1323
        %v1329 = vmul.f32 %v1293, %v1323
        %v1330 = vmul.f32 %v1294, %v1323
        %v1331 = vmul.f32 %v1295, %v1323
        %v1332 = vmul.f32 %v1296, %v1323
        %v1333 = vmul.f32 %v1297, %v1323
        %v1334 = vmul.f32 %v1298, %v1323
        %v1335 = vmul.f32 %v1299, %v1323
        %v1336 = vmul.f32 %v1300, %v1323
        %v1337 = vmul.f32 %v1301, %v1323
        %v1338 = vmul.f32 %v1302, %v1323
        %v1339 = vmul.f32 %v1303, %v1323
        %v1340 = vmul.f32 %v1304, %v1323
        %v1341 = vmul.f32 %v1305, %v1323
        %v1342 = vmul.f32 %v1306, %v1323
        %v1343 = vmul.f32 %v1307, %v1323
        %v1344 = vmul.f32 %v1308, %v1323
        %v1345 = vmul.f32 %v1309, %v1323
        %v1346 = vmul.f32 %v1310, %v1323
        %v1347 = vmul.f32 %v1311, %v1323
        %v1348 = vmul.f32 %v1312, %v1323
        %v1349 = vmul.f32 %v1313, %v1323
        %v1350 = vmul.f32 %v1314, %v1323
        %v1351 = vmul.f32 %v1315, %v1323
        %v1352 = vmul.f32 %v1316, %v1323
        %v1353 = vmul.f32 %v1317, %v1323
        %v1354 = vmul.f32 %v1318, %v1323
        %v1355 = vmul.f32 %v1319, %v1323
        %v1356 = vadd.f32 %v1256, %v1324
        %v1357 = vadd.f32 %v1257, %v1325
        %v1358 = vadd.f32 %v1258, %v1326
        %v1359 = vadd.f32 %v1259, %v1327
        %v1360 = vadd.f32 %v1260, %v1328
        %v1361 = vadd.f32 %v1261, %v1329
        %v1362 = vadd.f32 %v1262, %v1330
        %v1363 = vadd.f32 %v1263, %v1331
        %v1364 = vadd.f32 %v1264, %v1332
        %v1365 = vadd.f32 %v1265, %v1333
        %v1366 = vadd.f32 %v1266, %v1334
        %v1367 = vadd.f32 %v1267, %v1335
        %v1368 = vadd.f32 %v1268, %v1336
        %v1369 = vadd.f32 %v1269, %v1337
        %v1370 = vadd.f32 %v1270, %v1338
        %v1371 = vadd.f32 %v1271, %v1339
        %v1372 = vadd.f32 %v1272, %v1340
        %v1373 = vadd.f32 %v1273, %v1341
        %v1374 = vadd.f32 %v1274, %v1342
        %v1375 = vadd.f32 %v1275, %v1343
        %v1376 = vadd.f32 %v1276, %v1344
        %v1377 = vadd.f32 %v1277, %v1345
        %v1378 = vadd.f32 %v1278, %v1346
        %v1379 = vadd.f32 %v1279, %v1347
        %v1380 = vadd.f32 %v1280, %v1348
        %v1381 = vadd.f32 %v1281, %v1349
        %v1382 = vadd.f32 %v1282, %v1350
        %v1383 = vadd.f32 %v1283, %v1351
        %v1384 = vadd.f32 %v1284, %v1352
        %v1385 = vadd.f32 %v1285, %v1353
        %v1386 = vadd.f32 %v1286, %v1354
        %v1387 = vadd.f32 %v1287, %v1355
        %v1388 = vld [vmem:[%s1187 + $0x2] sm:$0xff]
        %v1389 = vld [vmem:[%s1187 + $0xa] sm:$0xff]
        %v1390 = vld [vmem:[%s1187 + $0x1a] sm:$0xff]
        %v1391 = vld [vmem:[%s1187 + $0x22] sm:$0xff]
        %v1392 = vld [vmem:[%s1187 + $0x32] sm:$0xff]
        %v1393 = vld [vmem:[%s1187 + $0x3a] sm:$0xff]
        %v1394 = vld [vmem:[%s1187 + $0x4a] sm:$0xff]
        %v1395 = vld [vmem:[%s1187 + $0x52] sm:$0xff]
        %v1396 = vld [vmem:[%s1187 + $0x62] sm:$0xff]
        %v1397 = vld [vmem:[%s1187 + $0x6a] sm:$0xff]
        %v1398 = vld [vmem:[%s1187 + $0x7a] sm:$0xff]
        %v1399 = vld [vmem:[%s1187 + $0x82] sm:$0xff]
        %v1400 = vld [vmem:[%s1187 + $0x92] sm:$0xff]
        %v1401 = vld [vmem:[%s1187 + $0x9a] sm:$0xff]
        %v1402 = vld [vmem:[%s1187 + $0xaa] sm:$0xff]
        %v1403 = vld [vmem:[%s1187 + $0xb2] sm:$0xff]
        %v1404 = vld [vmem:[%s1187 + $0xc2] sm:$0xff]
        %v1405 = vld [vmem:[%s1187 + $0xca] sm:$0xff]
        %v1406 = vld [vmem:[%s1187 + $0xda] sm:$0xff]
        %v1407 = vld [vmem:[%s1187 + $0xe2] sm:$0xff]
        %v1408 = vld [vmem:[%s1187 + $0xf2] sm:$0xff]
        %v1409 = vld [vmem:[%s1187 + $0xfa] sm:$0xff]
        %v1410 = vld [vmem:[%s1187 + $0x10a] sm:$0xff]
        %v1411 = vld [vmem:[%s1187 + $0x112] sm:$0xff]
        %v1412 = vld [vmem:[%s1187 + $0x122] sm:$0xff]
        %v1413 = vld [vmem:[%s1187 + $0x12a] sm:$0xff]
        %v1414 = vld [vmem:[%s1187 + $0x13a] sm:$0xff]
        %v1415 = vld [vmem:[%s1187 + $0x142] sm:$0xff]
        %v1416 = vld [vmem:[%s1187 + $0x152] sm:$0xff]
        %v1417 = vld [vmem:[%s1187 + $0x15a] sm:$0xff]
        %v1418 = vld [vmem:[%s1187 + $0x16a] sm:$0xff]
        %v1419 = vld [vmem:[%s1187 + $0x172] sm:$0xff]
        %v1420 = vlaneseq
        %v1421 = vshrl.u32 %v1420, 7
        %v1422 = vsub.s32 4, %v1421
        %v1423 = vrot.slane %v185, %v1422
        %v1424 = vmul.f32 %v1388, %v1423
        %v1425 = vmul.f32 %v1389, %v1423
        %v1426 = vmul.f32 %v1390, %v1423
        %v1427 = vmul.f32 %v1391, %v1423
        %v1428 = vmul.f32 %v1392, %v1423
        %v1429 = vmul.f32 %v1393, %v1423
        %v1430 = vmul.f32 %v1394, %v1423
        %v1431 = vmul.f32 %v1395, %v1423
        %v1432 = vmul.f32 %v1396, %v1423
        %v1433 = vmul.f32 %v1397, %v1423
        %v1434 = vmul.f32 %v1398, %v1423
        %v1435 = vmul.f32 %v1399, %v1423
        %v1436 = vmul.f32 %v1400, %v1423
        %v1437 = vmul.f32 %v1401, %v1423
        %v1438 = vmul.f32 %v1402, %v1423
        %v1439 = vmul.f32 %v1403, %v1423
        %v1440 = vmul.f32 %v1404, %v1423
        %v1441 = vmul.f32 %v1405, %v1423
        %v1442 = vmul.f32 %v1406, %v1423
        %v1443 = vmul.f32 %v1407, %v1423
        %v1444 = vmul.f32 %v1408, %v1423
        %v1445 = vmul.f32 %v1409, %v1423
        %v1446 = vmul.f32 %v1410, %v1423
        %v1447 = vmul.f32 %v1411, %v1423
        %v1448 = vmul.f32 %v1412, %v1423
        %v1449 = vmul.f32 %v1413, %v1423
        %v1450 = vmul.f32 %v1414, %v1423
        %v1451 = vmul.f32 %v1415, %v1423
        %v1452 = vmul.f32 %v1416, %v1423
        %v1453 = vmul.f32 %v1417, %v1423
        %v1454 = vmul.f32 %v1418, %v1423
        %v1455 = vmul.f32 %v1419, %v1423
        %v1456 = vadd.f32 %v1356, %v1424
        %v1457 = vadd.f32 %v1357, %v1425
        %v1458 = vadd.f32 %v1358, %v1426
        %v1459 = vadd.f32 %v1359, %v1427
        %v1460 = vadd.f32 %v1360, %v1428
        %v1461 = vadd.f32 %v1361, %v1429
        %v1462 = vadd.f32 %v1362, %v1430
        %v1463 = vadd.f32 %v1363, %v1431
        %v1464 = vadd.f32 %v1364, %v1432
        %v1465 = vadd.f32 %v1365, %v1433
        %v1466 = vadd.f32 %v1366, %v1434
        %v1467 = vadd.f32 %v1367, %v1435
        %v1468 = vadd.f32 %v1368, %v1436
        %v1469 = vadd.f32 %v1369, %v1437
        %v1470 = vadd.f32 %v1370, %v1438
        %v1471 = vadd.f32 %v1371, %v1439
        %v1472 = vadd.f32 %v1372, %v1440
        %v1473 = vadd.f32 %v1373, %v1441
        %v1474 = vadd.f32 %v1374, %v1442
        %v1475 = vadd.f32 %v1375, %v1443
        %v1476 = vadd.f32 %v1376, %v1444
        %v1477 = vadd.f32 %v1377, %v1445
        %v1478 = vadd.f32 %v1378, %v1446
        %v1479 = vadd.f32 %v1379, %v1447
        %v1480 = vadd.f32 %v1380, %v1448
        %v1481 = vadd.f32 %v1381, %v1449
        %v1482 = vadd.f32 %v1382, %v1450
        %v1483 = vadd.f32 %v1383, %v1451
        %v1484 = vadd.f32 %v1384, %v1452
        %v1485 = vadd.f32 %v1385, %v1453
        %v1486 = vadd.f32 %v1386, %v1454
        %v1487 = vadd.f32 %v1387, %v1455
        %v1488 = vld [vmem:[%s1187 + $0x3] sm:$0xff]
        %v1489 = vld [vmem:[%s1187 + $0xb] sm:$0xff]
        %v1490 = vld [vmem:[%s1187 + $0x1b] sm:$0xff]
        %v1491 = vld [vmem:[%s1187 + $0x23] sm:$0xff]
        %v1492 = vld [vmem:[%s1187 + $0x33] sm:$0xff]
        %v1493 = vld [vmem:[%s1187 + $0x3b] sm:$0xff]
        %v1494 = vld [vmem:[%s1187 + $0x4b] sm:$0xff]
        %v1495 = vld [vmem:[%s1187 + $0x53] sm:$0xff]
        %v1496 = vld [vmem:[%s1187 + $0x63] sm:$0xff]
        %v1497 = vld [vmem:[%s1187 + $0x6b] sm:$0xff]
        %v1498 = vld [vmem:[%s1187 + $0x7b] sm:$0xff]
        %v1499 = vld [vmem:[%s1187 + $0x83] sm:$0xff]
        %v1500 = vld [vmem:[%s1187 + $0x93] sm:$0xff]
        %v1501 = vld [vmem:[%s1187 + $0x9b] sm:$0xff]
        %v1502 = vld [vmem:[%s1187 + $0xab] sm:$0xff]
        %v1503 = vld [vmem:[%s1187 + $0xb3] sm:$0xff]
        %v1504 = vld [vmem:[%s1187 + $0xc3] sm:$0xff]
        %v1505 = vld [vmem:[%s1187 + $0xcb] sm:$0xff]
        %v1506 = vld [vmem:[%s1187 + $0xdb] sm:$0xff]
        %v1507 = vld [vmem:[%s1187 + $0xe3] sm:$0xff]
        %v1508 = vld [vmem:[%s1187 + $0xf3] sm:$0xff]
        %v1509 = vld [vmem:[%s1187 + $0xfb] sm:$0xff]
        %v1510 = vld [vmem:[%s1187 + $0x10b] sm:$0xff]
        %v1511 = vld [vmem:[%s1187 + $0x113] sm:$0xff]
        %v1512 = vld [vmem:[%s1187 + $0x123] sm:$0xff]
        %v1513 = vld [vmem:[%s1187 + $0x12b] sm:$0xff]
        %v1514 = vld [vmem:[%s1187 + $0x13b] sm:$0xff]
        %v1515 = vld [vmem:[%s1187 + $0x143] sm:$0xff]
        %v1516 = vld [vmem:[%s1187 + $0x153] sm:$0xff]
        %v1517 = vld [vmem:[%s1187 + $0x15b] sm:$0xff]
        %v1518 = vld [vmem:[%s1187 + $0x16b] sm:$0xff]
        %v1519 = vld [vmem:[%s1187 + $0x173] sm:$0xff]
        %v1520 = vlaneseq
        %v1521 = vshrl.u32 %v1520, 7
        %v1522 = vsub.s32 5, %v1521
        %v1523 = vrot.slane %v185, %v1522
        %v1524 = vmul.f32 %v1488, %v1523
        %v1525 = vmul.f32 %v1489, %v1523
        %v1526 = vmul.f32 %v1490, %v1523
        %v1527 = vmul.f32 %v1491, %v1523
        %v1528 = vmul.f32 %v1492, %v1523
        %v1529 = vmul.f32 %v1493, %v1523
        %v1530 = vmul.f32 %v1494, %v1523
        %v1531 = vmul.f32 %v1495, %v1523
        %v1532 = vmul.f32 %v1496, %v1523
        %v1533 = vmul.f32 %v1497, %v1523
        %v1534 = vmul.f32 %v1498, %v1523
        %v1535 = vmul.f32 %v1499, %v1523
        %v1536 = vmul.f32 %v1500, %v1523
        %v1537 = vmul.f32 %v1501, %v1523
        %v1538 = vmul.f32 %v1502, %v1523
        %v1539 = vmul.f32 %v1503, %v1523
        %v1540 = vmul.f32 %v1504, %v1523
        %v1541 = vmul.f32 %v1505, %v1523
        %v1542 = vmul.f32 %v1506, %v1523
        %v1543 = vmul.f32 %v1507, %v1523
        %v1544 = vmul.f32 %v1508, %v1523
        %v1545 = vmul.f32 %v1509, %v1523
        %v1546 = vmul.f32 %v1510, %v1523
        %v1547 = vmul.f32 %v1511, %v1523
        %v1548 = vmul.f32 %v1512, %v1523
        %v1549 = vmul.f32 %v1513, %v1523
        %v1550 = vmul.f32 %v1514, %v1523
        %v1551 = vmul.f32 %v1515, %v1523
        %v1552 = vmul.f32 %v1516, %v1523
        %v1553 = vmul.f32 %v1517, %v1523
        %v1554 = vmul.f32 %v1518, %v1523
        %v1555 = vmul.f32 %v1519, %v1523
        %v1556 = vadd.f32 %v1456, %v1524
        %v1557 = vadd.f32 %v1457, %v1525
        %v1558 = vadd.f32 %v1458, %v1526
        %v1559 = vadd.f32 %v1459, %v1527
        %v1560 = vadd.f32 %v1460, %v1528
        %v1561 = vadd.f32 %v1461, %v1529
        %v1562 = vadd.f32 %v1462, %v1530
        %v1563 = vadd.f32 %v1463, %v1531
        %v1564 = vadd.f32 %v1464, %v1532
        %v1565 = vadd.f32 %v1465, %v1533
        %v1566 = vadd.f32 %v1466, %v1534
        %v1567 = vadd.f32 %v1467, %v1535
        %v1568 = vadd.f32 %v1468, %v1536
        %v1569 = vadd.f32 %v1469, %v1537
        %v1570 = vadd.f32 %v1470, %v1538
        %v1571 = vadd.f32 %v1471, %v1539
        %v1572 = vadd.f32 %v1472, %v1540
        %v1573 = vadd.f32 %v1473, %v1541
        %v1574 = vadd.f32 %v1474, %v1542
        %v1575 = vadd.f32 %v1475, %v1543
        %v1576 = vadd.f32 %v1476, %v1544
        %v1577 = vadd.f32 %v1477, %v1545
        %v1578 = vadd.f32 %v1478, %v1546
        %v1579 = vadd.f32 %v1479, %v1547
        %v1580 = vadd.f32 %v1480, %v1548
        %v1581 = vadd.f32 %v1481, %v1549
        %v1582 = vadd.f32 %v1482, %v1550
        %v1583 = vadd.f32 %v1483, %v1551
        %v1584 = vadd.f32 %v1484, %v1552
        %v1585 = vadd.f32 %v1485, %v1553
        %v1586 = vadd.f32 %v1486, %v1554
        %v1587 = vadd.f32 %v1487, %v1555
        %v1588 = vld [vmem:[%s1187 + $0x4] sm:$0xff]
        %v1589 = vld [vmem:[%s1187 + $0xc] sm:$0xff]
        %v1590 = vld [vmem:[%s1187 + $0x1c] sm:$0xff]
        %v1591 = vld [vmem:[%s1187 + $0x24] sm:$0xff]
        %v1592 = vld [vmem:[%s1187 + $0x34] sm:$0xff]
        %v1593 = vld [vmem:[%s1187 + $0x3c] sm:$0xff]
        %v1594 = vld [vmem:[%s1187 + $0x4c] sm:$0xff]
        %v1595 = vld [vmem:[%s1187 + $0x54] sm:$0xff]
        %v1596 = vld [vmem:[%s1187 + $0x64] sm:$0xff]
        %v1597 = vld [vmem:[%s1187 + $0x6c] sm:$0xff]
        %v1598 = vld [vmem:[%s1187 + $0x7c] sm:$0xff]
        %v1599 = vld [vmem:[%s1187 + $0x84] sm:$0xff]
        %v1600 = vld [vmem:[%s1187 + $0x94] sm:$0xff]
        %v1601 = vld [vmem:[%s1187 + $0x9c] sm:$0xff]
        %v1602 = vld [vmem:[%s1187 + $0xac] sm:$0xff]
        %v1603 = vld [vmem:[%s1187 + $0xb4] sm:$0xff]
        %v1604 = vld [vmem:[%s1187 + $0xc4] sm:$0xff]
        %v1605 = vld [vmem:[%s1187 + $0xcc] sm:$0xff]
        %v1606 = vld [vmem:[%s1187 + $0xdc] sm:$0xff]
        %v1607 = vld [vmem:[%s1187 + $0xe4] sm:$0xff]
        %v1608 = vld [vmem:[%s1187 + $0xf4] sm:$0xff]
        %v1609 = vld [vmem:[%s1187 + $0xfc] sm:$0xff]
        %v1610 = vld [vmem:[%s1187 + $0x10c] sm:$0xff]
        %v1611 = vld [vmem:[%s1187 + $0x114] sm:$0xff]
        %v1612 = vld [vmem:[%s1187 + $0x124] sm:$0xff]
        %v1613 = vld [vmem:[%s1187 + $0x12c] sm:$0xff]
        %v1614 = vld [vmem:[%s1187 + $0x13c] sm:$0xff]
        %v1615 = vld [vmem:[%s1187 + $0x144] sm:$0xff]
        %v1616 = vld [vmem:[%s1187 + $0x154] sm:$0xff]
        %v1617 = vld [vmem:[%s1187 + $0x15c] sm:$0xff]
        %v1618 = vld [vmem:[%s1187 + $0x16c] sm:$0xff]
        %v1619 = vld [vmem:[%s1187 + $0x174] sm:$0xff]
        %v1620 = vlaneseq
        %v1621 = vshrl.u32 %v1620, 7
        %v1622 = vsub.s32 6, %v1621
        %v1623 = vrot.slane %v185, %v1622
        %v1624 = vmul.f32 %v1588, %v1623
        %v1625 = vmul.f32 %v1589, %v1623
        %v1626 = vmul.f32 %v1590, %v1623
        %v1627 = vmul.f32 %v1591, %v1623
        %v1628 = vmul.f32 %v1592, %v1623
        %v1629 = vmul.f32 %v1593, %v1623
        %v1630 = vmul.f32 %v1594, %v1623
        %v1631 = vmul.f32 %v1595, %v1623
        %v1632 = vmul.f32 %v1596, %v1623
        %v1633 = vmul.f32 %v1597, %v1623
        %v1634 = vmul.f32 %v1598, %v1623
        %v1635 = vmul.f32 %v1599, %v1623
        %v1636 = vmul.f32 %v1600, %v1623
        %v1637 = vmul.f32 %v1601, %v1623
        %v1638 = vmul.f32 %v1602, %v1623
        %v1639 = vmul.f32 %v1603, %v1623
        %v1640 = vmul.f32 %v1604, %v1623
        %v1641 = vmul.f32 %v1605, %v1623
        %v1642 = vmul.f32 %v1606, %v1623
        %v1643 = vmul.f32 %v1607, %v1623
        %v1644 = vmul.f32 %v1608, %v1623
        %v1645 = vmul.f32 %v1609, %v1623
        %v1646 = vmul.f32 %v1610, %v1623
        %v1647 = vmul.f32 %v1611, %v1623
        %v1648 = vmul.f32 %v1612, %v1623
        %v1649 = vmul.f32 %v1613, %v1623
        %v1650 = vmul.f32 %v1614, %v1623
        %v1651 = vmul.f32 %v1615, %v1623
        %v1652 = vmul.f32 %v1616, %v1623
        %v1653 = vmul.f32 %v1617, %v1623
        %v1654 = vmul.f32 %v1618, %v1623
        %v1655 = vmul.f32 %v1619, %v1623
        %v1656 = vadd.f32 %v1556, %v1624
        %v1657 = vadd.f32 %v1557, %v1625
        %v1658 = vadd.f32 %v1558, %v1626
        %v1659 = vadd.f32 %v1559, %v1627
        %v1660 = vadd.f32 %v1560, %v1628
        %v1661 = vadd.f32 %v1561, %v1629
        %v1662 = vadd.f32 %v1562, %v1630
        %v1663 = vadd.f32 %v1563, %v1631
        %v1664 = vadd.f32 %v1564, %v1632
        %v1665 = vadd.f32 %v1565, %v1633
        %v1666 = vadd.f32 %v1566, %v1634
        %v1667 = vadd.f32 %v1567, %v1635
        %v1668 = vadd.f32 %v1568, %v1636
        %v1669 = vadd.f32 %v1569, %v1637
        %v1670 = vadd.f32 %v1570, %v1638
        %v1671 = vadd.f32 %v1571, %v1639
        %v1672 = vadd.f32 %v1572, %v1640
        %v1673 = vadd.f32 %v1573, %v1641
        %v1674 = vadd.f32 %v1574, %v1642
        %v1675 = vadd.f32 %v1575, %v1643
        %v1676 = vadd.f32 %v1576, %v1644
        %v1677 = vadd.f32 %v1577, %v1645
        %v1678 = vadd.f32 %v1578, %v1646
        %v1679 = vadd.f32 %v1579, %v1647
        %v1680 = vadd.f32 %v1580, %v1648
        %v1681 = vadd.f32 %v1581, %v1649
        %v1682 = vadd.f32 %v1582, %v1650
        %v1683 = vadd.f32 %v1583, %v1651
        %v1684 = vadd.f32 %v1584, %v1652
        %v1685 = vadd.f32 %v1585, %v1653
        %v1686 = vadd.f32 %v1586, %v1654
        %v1687 = vadd.f32 %v1587, %v1655
        %1688 = vst [vmem:[%s171] sm:$0xff] %v1656
        %1689 = vst [vmem:[%s171 + $0x8] sm:$0xff] %v1657
        %1690 = vst [vmem:[%s171 + $0x10] sm:$0xff] %v1658
        %1691 = vst [vmem:[%s171 + $0x18] sm:$0xff] %v1659
        %1692 = vst [vmem:[%s171 + $0x20] sm:$0xff] %v1660
        %1693 = vst [vmem:[%s171 + $0x28] sm:$0xff] %v1661
        %1694 = vst [vmem:[%s171 + $0x30] sm:$0xff] %v1662
        %1695 = vst [vmem:[%s171 + $0x38] sm:$0xff] %v1663
        %1696 = vst [vmem:[%s171 + $0x40] sm:$0xff] %v1664
        %1697 = vst [vmem:[%s171 + $0x48] sm:$0xff] %v1665
        %1698 = vst [vmem:[%s171 + $0x50] sm:$0xff] %v1666
        %1699 = vst [vmem:[%s171 + $0x58] sm:$0xff] %v1667
        %1700 = vst [vmem:[%s171 + $0x60] sm:$0xff] %v1668
        %1701 = vst [vmem:[%s171 + $0x68] sm:$0xff] %v1669
        %1702 = vst [vmem:[%s171 + $0x70] sm:$0xff] %v1670
        %1703 = vst [vmem:[%s171 + $0x78] sm:$0xff] %v1671
        %1704 = vst [vmem:[%s171 + $0x80] sm:$0xff] %v1672
        %1705 = vst [vmem:[%s171 + $0x88] sm:$0xff] %v1673
        %1706 = vst [vmem:[%s171 + $0x90] sm:$0xff] %v1674
        %1707 = vst [vmem:[%s171 + $0x98] sm:$0xff] %v1675
        %1708 = vst [vmem:[%s171 + $0xa0] sm:$0xff] %v1676
        %1709 = vst [vmem:[%s171 + $0xa8] sm:$0xff] %v1677
        %1710 = vst [vmem:[%s171 + $0xb0] sm:$0xff] %v1678
        %1711 = vst [vmem:[%s171 + $0xb8] sm:$0xff] %v1679
        %1712 = vst [vmem:[%s171 + $0xc0] sm:$0xff] %v1680
        %1713 = vst [vmem:[%s171 + $0xc8] sm:$0xff] %v1681
        %1714 = vst [vmem:[%s171 + $0xd0] sm:$0xff] %v1682
        %1715 = vst [vmem:[%s171 + $0xd8] sm:$0xff] %v1683
        %1716 = vst [vmem:[%s171 + $0xe0] sm:$0xff] %v1684
        %1717 = vst [vmem:[%s171 + $0xe8] sm:$0xff] %v1685
        %1718 = vst [vmem:[%s171 + $0xf0] sm:$0xff] %v1686
        %1719 = vst [vmem:[%s171 + $0xf8] sm:$0xff] %v1687
        %s1720 = sand.u32 %s92, 1
        %s1721 = scalar_lea.sflag [#allocation3], %s1720
        %s1722 = sand.u32 %s92, 1
        %s1723 = smul.addr %s1722, 256
        %s1724 = scalar_lea.vmem [#allocation2], %s1723
        // Predicated region
        $region29: #{tpu_custom_call.1} parent=27 // pred_check
          %p1725 = pneg %p102
        $region30: #{tpu_custom_call.1} parent=27 // pred_check_branch
          %1727 = sbr.rel (%p1725) target = $region32
        $region31: #{tpu_custom_call.1} parent=27 // pred_region
          %s1729 = ssub.s32 4096, 4096
          %1730 = vsyncadd %s1721, %s1729
          %s1731 = smul.addr %s20, 32
          %s1732 = sadd.s32 %s21, %s1731
          %s1733 = smul.addr %s1732, 128
          %s1734 = scalar_lea.hbm %s2, %s1733
          %s1735 = sshll.u32 %s1724, 4
          %s1736 = int_to_ptr.vmem [resolvable:$true] %s1735
          %1741 = dma.vmem_to_hbm [thread:$0]  %s1736, 4096, %s1734, %s1721, 128, 128, 8
        $region32: #{tpu_custom_call.1} parent=27 // pred_fallthru
          _
      $region28: #{tpu_custom_call.1} parent=5 // pred_fallthru
        _
      %p1742 = scmp.le.s32.totalorder 2, %s11
      // Predicated region
      $region33: #{tpu_custom_call.1} parent=5 // pred_check
        %p1743 = pneg %p1742
      $region34: #{tpu_custom_call.1} parent=5 // pred_check_branch
        %1745 = sbr.rel (%p1743) target = $region36
      $region35: #{tpu_custom_call.1} parent=5 // pred_region
        %s1746 = ssub.s32 %s11, 2
        // Predicated region
        $region37: #{tpu_custom_call.1} parent=35 // pred_check
          %p1747 = pneg %p108
        $region38: #{tpu_custom_call.1} parent=35 // pred_check_branch
          %1749 = sbr.rel (%p1747) target = $region40
        $region39: #{tpu_custom_call.1} parent=35 // pred_region
          %s1750 = sand.u32 %s93, 1
          %s1751 = scalar_lea.sflag [#allocation3], %s1750
          %s1752 = sand.u32 %s93, 1
          %s1753 = smul.addr %s1752, 256
          %s1754 = scalar_lea.vmem [#allocation2], %s1753
          %1755 = dma.done %s1751, 4096
        $region40: #{tpu_custom_call.1} parent=35 // pred_fallthru
          _
      $region36: #{tpu_custom_call.1} parent=5 // pred_fallthru
        _
    $region6: #{tpu_custom_call.1} parent=1 // loop_footer
      %s15 = sadd.s32 1, %s11
    $region7: #{tpu_custom_call.1} parent=1 // loop_footer_branch
      %10 = sbr.rel target = $region3
    $region8: #{tpu_custom_call.1} parent=1 // loop_exit
      _
    %1756 = vsyncpa [#allocation3], 1
    %s1757 = scalar_lea.sflag [#allocation3], 1
    %1758 = vsyncpa %s1757, 1

</llo_original>
